<compile_context>
chip_gen: v7x
topology: tpu7x:2x2x1
jax: 0.10.0
libtpu: 0.0.40
codegen_flags: <defaults>
</compile_context>

<pallas_src>
import jax
import jax.numpy as jnp
import numpy as np
from jax.experimental import pallas as pl
from jax.experimental.pallas import tpu as pltpu


def _round_up(x, m):
    return (x + m - 1) // m * m


def _pick_row_tile(N, H, W, target_rows=2048):
    """Largest divisor of H with TH*W <= target_rows; prefer an even step count."""
    th = 1
    for cand in range(1, H + 1):
        if H % cand == 0 and cand * W <= target_rows:
            th = cand
    if (N * (H // th)) % 2 == 1:  # v7x: 2 TensorCores want an even grid split
        for cand in range(th - 1, 0, -1):
            if H % cand == 0 and (N * (H // cand)) % 2 == 0:
                th = cand
                break
    return th


def _make_kernels(K, W, TH, C_pad):
    """Build the stats and the conv+bn+relu kernels for fixed static shapes."""

    def _conv_row(x_ref, w_ref, prow):
        # x_ref: (Hp, Wp, Cin) bf16 padded image (resident in VMEM)
        # w_ref: (K*K, Cin, C_pad) bf16 reshaped conv weight (resident)
        # prow : padded-input row index of the first tap (== output row index)
        acc = jnp.zeros((W, C_pad), jnp.float32)
        for kh in range(K):
            row = x_ref[prow + kh]                       # (Wp, Cin) bf16
            for kw in range(K):
                acc = acc + jnp.dot(row[kw:kw + W, :], w_ref[kh * K + kw],
                                    preferred_element_type=jnp.float32)
        return acc                                        # (W, C_pad) f32

    def stats_kernel(x_ref, w_ref, ssum_ref, ssq_ref):
        # ssum_ref / ssq_ref: (1, 1, C_pad) per-(image, row-tile) partial stats
        row0 = pl.program_id(1) * TH

        def body(h, carry):
            s, q = carry
            y = _conv_row(x_ref, w_ref, row0 + h)
            return (s + jnp.sum(y, axis=0, keepdims=True),
                    q + jnp.sum(y * y, axis=0, keepdims=True))

        zeros = jnp.zeros((1, C_pad), jnp.float32)
        s, q = jax.lax.fori_loop(0, TH, body, (zeros, zeros))
        ssum_ref[0] = s
        ssq_ref[0] = q

    def apply_kernel(x_ref, w_ref, scale_ref, shift_ref, o_ref):
        # o_ref: (TH, W, C_pad) f32 final (normalized + ReLU) output tile
        row0 = pl.program_id(1) * TH
        scale = scale_ref[...]                            # (1, C_pad) f32
        shift = shift_ref[...]

        def body(h, carry):
            y = _conv_row(x_ref, w_ref, row0 + h)
            o_ref[h] = jnp.maximum(y * scale + shift, 0.0).astype(o_ref.dtype)
            return carry

        jax.lax.fori_loop(0, TH, body, 0)

    return stats_kernel, apply_kernel


def conv_bn_relu(x_nchw, weight, bias, gamma, beta, eps=1e-5):
    """Forward of ConvBnRelu.  x_nchw: (N, Cin, H, W), weight: (Cout, Cin, K, K).

    `bias` is accepted for API parity but BN's mean subtraction cancels a
    per-channel conv bias exactly, so it never enters the kernels.
    """
    N, Cin, H, W = x_nchw.shape
    Cout, Cin_w, K, Kw = weight.shape
    assert Cin_w == Cin and K == Kw and K % 2 == 1, "square odd kernel ('same')"
    pad = (K - 1) // 2
    Hp, Wp = H + 2 * pad, W + 2 * pad
    KK = K * K

    # Lane-dense output channels: 128 when Cout<=128, else 256-multiples
    # (v6e/v7x MXUs are 2x256^2; on v5e 128-multiples are already full width).
    C_pad = 128 if Cout <= 128 else _round_up(Cout, 256)

    TH = _pick_row_tile(N, H, W)
    n_h = H // TH
    n_steps = N * n_h
    grid = (N, n_h)

    # ---- glue: NCHW -> padded NHWC, bf16 MXU inputs (no compute) ----
    # TODO(synk): if the surrounding model is NHWC these transposes disappear.
    x = jnp.transpose(x_nchw, (0, 2, 3, 1)).astype(jnp.bfloat16)
    xp = jnp.pad(x, ((0, 0), (pad, pad), (pad, pad), (0, 0)))   # (N, Hp, Wp, Cin)
    w2 = jnp.transpose(weight, (2, 3, 1, 0)).reshape(KK, Cin, Cout)
    w2 = jnp.pad(w2.astype(jnp.bfloat16), ((0, 0), (0, 0), (0, C_pad - Cout)))

    stats_kernel, apply_kernel = _make_kernels(K, W, TH, C_pad)

    x_spec = pl.BlockSpec((None, Hp, Wp, Cin), lambda n, j: (n, 0, 0, 0))
    w_spec = pl.BlockSpec((KK, Cin, C_pad), lambda n, j: (0, 0, 0))
    stat_spec = pl.BlockSpec((1, 1, C_pad), lambda n, j: (n * n_h + j, 0, 0))
    params = pltpu.CompilerParams(
        dimension_semantics=("parallel", "parallel"),
        vmem_limit_bytes=32 * 1024 * 1024)

    # ---- pass 1: in-kernel im2col conv, per-tile BN partial stats only ----
    ssum, ssq = pl.pallas_call(
        stats_kernel,
        out_shape=(jax.ShapeDtypeStruct((n_steps, 1, C_pad), jnp.float32),
                   jax.ShapeDtypeStruct((n_steps, 1, C_pad), jnp.float32)),
        grid=grid,
        in_specs=[x_spec, w_spec],
        out_specs=(stat_spec, stat_spec),
        compiler_params=params,
    )(xp, w2)

    # ---- tiny O(Cout) finalize in the wrapper (not a hot path) ----
    m = float(N * H * W)
    total_sum = jnp.sum(ssum, axis=0)[0]                  # (C_pad,)
    total_sq = jnp.sum(ssq, axis=0)[0]
    mean = total_sum / m
    # NOTE: E[y^2]-E[y]^2 can cancel when |mean| >> std; conv outputs here are
    # near zero-mean (bias cancelled by BN), acceptable in f32.
    var = jnp.maximum(total_sq / m - mean * mean, 0.0)    # biased batch variance
    inv_std = jax.lax.rsqrt(var + eps)
    gamma_p = jnp.pad(gamma.astype(jnp.float32), (0, C_pad - Cout))
    beta_p = jnp.pad(beta.astype(jnp.float32), (0, C_pad - Cout))
    scale = (gamma_p * inv_std).reshape(1, C_pad)
    shift = (beta_p - mean * gamma_p * inv_std).reshape(1, C_pad)

    # ---- pass 2: recompute conv, apply scale/shift + ReLU, write output ----
    vec_spec = pl.BlockSpec((1, C_pad), lambda n, j: (0, 0))
    out_pad = pl.pallas_call(
        apply_kernel,
        out_shape=jax.ShapeDtypeStruct((N, H, W, C_pad), jnp.float32),
        grid=grid,
        in_specs=[x_spec, w_spec, vec_spec, vec_spec],
        out_specs=pl.BlockSpec((None, TH, W, C_pad), lambda n, j: (n, j, 0, 0)),
        compiler_params=params,
    )(xp, w2, scale, shift)

    # ---- glue: crop channel padding, back to NCHW ----
    return jnp.transpose(out_pad[..., :Cout], (0, 3, 1, 2))


def _reference(x, weight, bias, gamma, beta, eps=1e-5):
    y = jax.lax.conv_general_dilated(
        x, weight, window_strides=(1, 1), padding="SAME",
        dimension_numbers=("NCHW", "OIHW", "NCHW"),
    ) + bias.reshape(1, -1, 1, 1)
    mean = jnp.mean(y, axis=(0, 2, 3), keepdims=True)
    var = jnp.var(y, axis=(0, 2, 3), keepdims=True)
    y = (y - mean) * jax.lax.rsqrt(var + eps) * gamma.reshape(1, -1, 1, 1) \
        + beta.reshape(1, -1, 1, 1)
    return jnp.maximum(y, 0.0)


if __name__ == "__main__":
    # ConvBnRelu(in_channels=4, out_channels=8, kernel_size=3)
    N, Cin, H, W = 2, 4, 16, 16
    Cout, K = 8, 3

    key = jax.random.PRNGKey(0)
    kx, kw, kb = jax.random.split(key, 3)
    x = jax.random.normal(kx, (N, Cin, H, W), dtype=jnp.float32)
    fan_in = Cin * K * K
    weight = jax.random.normal(kw, (Cout, Cin, K, K), dtype=jnp.float32) / np.sqrt(fan_in)
    bias = jax.random.normal(kb, (Cout,), dtype=jnp.float32) * 0.1
    gamma = jnp.ones((Cout,), dtype=jnp.float32)   # BatchNorm2d affine weight init
    beta = jnp.zeros((Cout,), dtype=jnp.float32)   # BatchNorm2d affine bias init

    fwd = jax.jit(conv_bn_relu)
    out = jax.block_until_ready(fwd(x, weight, bias, gamma, beta))
    assert out.shape == (N, Cout, H, W), out.shape

    # Check 1 (tight): same math as the kernel — conv on bf16-quantized inputs
    # with f32 accumulation, BN/ReLU in f32.  Validates the kernel structure.
    xq = x.astype(jnp.bfloat16).astype(jnp.float32)
    wq = weight.astype(jnp.bfloat16).astype(jnp.float32)
    ref_q = jax.block_until_ready(_reference(xq, wq, bias, gamma, beta))
    np.testing.assert_allclose(np.asarray(out), np.asarray(ref_q), atol=1e-4, rtol=1e-4)

    # Check 2 (loose): full-f32 reference; deviation is only the bf16 MXU-input
    # quantization, bounded well below 1e-2 at these scales.
    ref_f32 = jax.block_until_ready(_reference(x, weight, bias, gamma, beta))
    np.testing.assert_allclose(np.asarray(out), np.asarray(ref_f32), atol=1e-2, rtol=1e-2)

    print("KERNEL_OK")
</pallas_src>

<mosaic_0001>
module attributes {stable_mosaic.version = 11 : i64} {
  func.func @stats_kernel(%arg0: i32, %arg1: i32, %arg2: memref<1x18x18x4xbf16, #tpu.memory_space<vmem>>, %arg3: memref<9x4x128xbf16, #tpu.memory_space<vmem>>, %arg4: memref<1x1x128xf32, #tpu.memory_space<vmem>>, %arg5: memref<1x1x128xf32, #tpu.memory_space<vmem>>) attributes {dimension_semantics = [#tpu.dimension_semantics<parallel>, #tpu.dimension_semantics<parallel>], iteration_bounds = array<i64: 2, 1>, scalar_prefetch = 0 : i64, scratch_operands = 0 : i64, tpu.core_type = #tpu.core_type<tc>, window_params = [{transform_indices = @transform_0, window_bounds = array<i64: 1, 18, 18, 4>}, {pipeline_mode = #tpu.pipeline_mode<synchronous>, transform_indices = @transform_1, window_bounds = array<i64: 9, 4, 128>}, {transform_indices = @transform_2, window_bounds = array<i64: 1, 1, 128>}, {transform_indices = @transform_3, window_bounds = array<i64: 1, 1, 128>}]} {
    %c16_i32 = arith.constant 16 : i32
    %0 = arith.muli %arg1, %c16_i32 : i32
    %cst = arith.constant 0.000000e+00 : f32
    %1 = vector.broadcast %cst : f32 to vector<1x128xf32>
    %c0_i32 = arith.constant 0 : i32
    %c16_i32_0 = arith.constant 16 : i32
    %2 = arith.addi %c0_i32, %c16_i32_0 : i32
    %c1_i32 = arith.constant 1 : i32
    %3:2 = scf.for %arg6 = %c0_i32 to %2 step %c1_i32 iter_args(%arg7 = %1, %arg8 = %1) -> (vector<1x128xf32>, vector<1x128xf32>)  : i32 {
      %10 = arith.addi %0, %arg6 : i32
      %cst_7 = arith.constant 0.000000e+00 : f32
      %11 = vector.broadcast %cst_7 : f32 to vector<16x128xf32>
      %c0_i32_8 = arith.constant 0 : i32
      %12 = arith.addi %10, %c0_i32_8 : i32
      %c0_9 = arith.constant 0 : index
      %13 = arith.index_cast %12 : i32 to index
      %c0_10 = arith.constant 0 : index
      %c0_11 = arith.constant 0 : index
      %14 = vector.load %arg2[%c0_9, %13, %c0_10, %c0_11] : memref<1x18x18x4xbf16, #tpu.memory_space<vmem>>, vector<1x1x18x4xbf16>
      %15 = vector.shape_cast %14 : vector<1x1x18x4xbf16> to vector<18x4xbf16>
      %16 = vector.extract_strided_slice %15 {offsets = [0, 0], sizes = [16, 4], strides = [1, 1]} : vector<18x4xbf16> to vector<16x4xbf16>
      %c0_12 = arith.constant 0 : index
      %c0_13 = arith.constant 0 : index
      %c0_14 = arith.constant 0 : index
      %17 = vector.load %arg3[%c0_12, %c0_13, %c0_14] : memref<9x4x128xbf16, #tpu.memory_space<vmem>>, vector<1x4x128xbf16>
      %18 = vector.shape_cast %17 : vector<1x4x128xbf16> to vector<4x128xbf16>
      %cst_15 = arith.constant dense<0.000000e+00> : vector<16x128xf32>
      %19 = tpu.matmul %16, %18, %cst_15 {dimension_numbers = #tpu.dot_dimension_numbers<[1], [0], [0], [1], [0, 0, 1, 1], [], []>} : vector<16x4xbf16>, vector<4x128xbf16>, vector<16x128xf32> -> vector<16x128xf32>
      %20 = arith.addf %11, %19 : vector<16x128xf32>
      %21 = vector.extract_strided_slice %15 {offsets = [1, 0], sizes = [16, 4], strides = [1, 1]} : vector<18x4xbf16> to vector<16x4xbf16>
      %c1 = arith.constant 1 : index
      %c0_16 = arith.constant 0 : index
      %c0_17 = arith.constant 0 : index
      %22 = vector.load %arg3[%c1, %c0_16, %c0_17] : memref<9x4x128xbf16, #tpu.memory_space<vmem>>, vector<1x4x128xbf16>
      %23 = vector.shape_cast %22 : vector<1x4x128xbf16> to vector<4x128xbf16>
      %cst_18 = arith.constant dense<0.000000e+00> : vector<16x128xf32>
      %24 = tpu.matmul %21, %23, %cst_18 {dimension_numbers = #tpu.dot_dimension_numbers<[1], [0], [0], [1], [0, 0, 1, 1], [], []>} : vector<16x4xbf16>, vector<4x128xbf16>, vector<16x128xf32> -> vector<16x128xf32>
      %25 = arith.addf %20, %24 : vector<16x128xf32>
      %26 = vector.extract_strided_slice %15 {offsets = [2, 0], sizes = [16, 4], strides = [1, 1]} : vector<18x4xbf16> to vector<16x4xbf16>
      %c2 = arith.constant 2 : index
      %c0_19 = arith.constant 0 : index
      %c0_20 = arith.constant 0 : index
      %27 = vector.load %arg3[%c2, %c0_19, %c0_20] : memref<9x4x128xbf16, #tpu.memory_space<vmem>>, vector<1x4x128xbf16>
      %28 = vector.shape_cast %27 : vector<1x4x128xbf16> to vector<4x128xbf16>
      %cst_21 = arith.constant dense<0.000000e+00> : vector<16x128xf32>
      %29 = tpu.matmul %26, %28, %cst_21 {dimension_numbers = #tpu.dot_dimension_numbers<[1], [0], [0], [1], [0, 0, 1, 1], [], []>} : vector<16x4xbf16>, vector<4x128xbf16>, vector<16x128xf32> -> vector<16x128xf32>
      %30 = arith.addf %25, %29 : vector<16x128xf32>
      %c1_i32_22 = arith.constant 1 : i32
      %31 = arith.addi %10, %c1_i32_22 : i32
      %c0_23 = arith.constant 0 : index
      %32 = arith.index_cast %31 : i32 to index
      %c0_24 = arith.constant 0 : index
      %c0_25 = arith.constant 0 : index
      %33 = vector.load %arg2[%c0_23, %32, %c0_24, %c0_25] : memref<1x18x18x4xbf16, #tpu.memory_space<vmem>>, vector<1x1x18x4xbf16>
      %34 = vector.shape_cast %33 : vector<1x1x18x4xbf16> to vector<18x4xbf16>
      %35 = vector.extract_strided_slice %34 {offsets = [0, 0], sizes = [16, 4], strides = [1, 1]} : vector<18x4xbf16> to vector<16x4xbf16>
      %c3 = arith.constant 3 : index
      %c0_26 = arith.constant 0 : index
      %c0_27 = arith.constant 0 : index
      %36 = vector.load %arg3[%c3, %c0_26, %c0_27] : memref<9x4x128xbf16, #tpu.memory_space<vmem>>, vector<1x4x128xbf16>
      %37 = vector.shape_cast %36 : vector<1x4x128xbf16> to vector<4x128xbf16>
      %cst_28 = arith.constant dense<0.000000e+00> : vector<16x128xf32>
      %38 = tpu.matmul %35, %37, %cst_28 {dimension_numbers = #tpu.dot_dimension_numbers<[1], [0], [0], [1], [0, 0, 1, 1], [], []>} : vector<16x4xbf16>, vector<4x128xbf16>, vector<16x128xf32> -> vector<16x128xf32>
      %39 = arith.addf %30, %38 : vector<16x128xf32>
      %40 = vector.extract_strided_slice %34 {offsets = [1, 0], sizes = [16, 4], strides = [1, 1]} : vector<18x4xbf16> to vector<16x4xbf16>
      %c4 = arith.constant 4 : index
      %c0_29 = arith.constant 0 : index
      %c0_30 = arith.constant 0 : index
      %41 = vector.load %arg3[%c4, %c0_29, %c0_30] : memref<9x4x128xbf16, #tpu.memory_space<vmem>>, vector<1x4x128xbf16>
      %42 = vector.shape_cast %41 : vector<1x4x128xbf16> to vector<4x128xbf16>
      %cst_31 = arith.constant dense<0.000000e+00> : vector<16x128xf32>
      %43 = tpu.matmul %40, %42, %cst_31 {dimension_numbers = #tpu.dot_dimension_numbers<[1], [0], [0], [1], [0, 0, 1, 1], [], []>} : vector<16x4xbf16>, vector<4x128xbf16>, vector<16x128xf32> -> vector<16x128xf32>
      %44 = arith.addf %39, %43 : vector<16x128xf32>
      %45 = vector.extract_strided_slice %34 {offsets = [2, 0], sizes = [16, 4], strides = [1, 1]} : vector<18x4xbf16> to vector<16x4xbf16>
      %c5 = arith.constant 5 : index
      %c0_32 = arith.constant 0 : index
      %c0_33 = arith.constant 0 : index
      %46 = vector.load %arg3[%c5, %c0_32, %c0_33] : memref<9x4x128xbf16, #tpu.memory_space<vmem>>, vector<1x4x128xbf16>
      %47 = vector.shape_cast %46 : vector<1x4x128xbf16> to vector<4x128xbf16>
      %cst_34 = arith.constant dense<0.000000e+00> : vector<16x128xf32>
      %48 = tpu.matmul %45, %47, %cst_34 {dimension_numbers = #tpu.dot_dimension_numbers<[1], [0], [0], [1], [0, 0, 1, 1], [], []>} : vector<16x4xbf16>, vector<4x128xbf16>, vector<16x128xf32> -> vector<16x128xf32>
      %49 = arith.addf %44, %48 : vector<16x128xf32>
      %c2_i32 = arith.constant 2 : i32
      %50 = arith.addi %10, %c2_i32 : i32
      %c0_35 = arith.constant 0 : index
      %51 = arith.index_cast %50 : i32 to index
      %c0_36 = arith.constant 0 : index
      %c0_37 = arith.constant 0 : index
      %52 = vector.load %arg2[%c0_35, %51, %c0_36, %c0_37] : memref<1x18x18x4xbf16, #tpu.memory_space<vmem>>, vector<1x1x18x4xbf16>
      %53 = vector.shape_cast %52 : vector<1x1x18x4xbf16> to vector<18x4xbf16>
      %54 = vector.extract_strided_slice %53 {offsets = [0, 0], sizes = [16, 4], strides = [1, 1]} : vector<18x4xbf16> to vector<16x4xbf16>
      %c6 = arith.constant 6 : index
      %c0_38 = arith.constant 0 : index
      %c0_39 = arith.constant 0 : index
      %55 = vector.load %arg3[%c6, %c0_38, %c0_39] : memref<9x4x128xbf16, #tpu.memory_space<vmem>>, vector<1x4x128xbf16>
      %56 = vector.shape_cast %55 : vector<1x4x128xbf16> to vector<4x128xbf16>
      %cst_40 = arith.constant dense<0.000000e+00> : vector<16x128xf32>
      %57 = tpu.matmul %54, %56, %cst_40 {dimension_numbers = #tpu.dot_dimension_numbers<[1], [0], [0], [1], [0, 0, 1, 1], [], []>} : vector<16x4xbf16>, vector<4x128xbf16>, vector<16x128xf32> -> vector<16x128xf32>
      %58 = arith.addf %49, %57 : vector<16x128xf32>
      %59 = vector.extract_strided_slice %53 {offsets = [1, 0], sizes = [16, 4], strides = [1, 1]} : vector<18x4xbf16> to vector<16x4xbf16>
      %c7 = arith.constant 7 : index
      %c0_41 = arith.constant 0 : index
      %c0_42 = arith.constant 0 : index
      %60 = vector.load %arg3[%c7, %c0_41, %c0_42] : memref<9x4x128xbf16, #tpu.memory_space<vmem>>, vector<1x4x128xbf16>
      %61 = vector.shape_cast %60 : vector<1x4x128xbf16> to vector<4x128xbf16>
      %cst_43 = arith.constant dense<0.000000e+00> : vector<16x128xf32>
      %62 = tpu.matmul %59, %61, %cst_43 {dimension_numbers = #tpu.dot_dimension_numbers<[1], [0], [0], [1], [0, 0, 1, 1], [], []>} : vector<16x4xbf16>, vector<4x128xbf16>, vector<16x128xf32> -> vector<16x128xf32>
      %63 = arith.addf %58, %62 : vector<16x128xf32>
      %64 = vector.extract_strided_slice %53 {offsets = [2, 0], sizes = [16, 4], strides = [1, 1]} : vector<18x4xbf16> to vector<16x4xbf16>
      %c8 = arith.constant 8 : index
      %c0_44 = arith.constant 0 : index
      %c0_45 = arith.constant 0 : index
      %65 = vector.load %arg3[%c8, %c0_44, %c0_45] : memref<9x4x128xbf16, #tpu.memory_space<vmem>>, vector<1x4x128xbf16>
      %66 = vector.shape_cast %65 : vector<1x4x128xbf16> to vector<4x128xbf16>
      %cst_46 = arith.constant dense<0.000000e+00> : vector<16x128xf32>
      %67 = tpu.matmul %64, %66, %cst_46 {dimension_numbers = #tpu.dot_dimension_numbers<[1], [0], [0], [1], [0, 0, 1, 1], [], []>} : vector<16x4xbf16>, vector<4x128xbf16>, vector<16x128xf32> -> vector<16x128xf32>
      %68 = arith.addf %63, %67 : vector<16x128xf32>
      %cst_47 = arith.constant dense<0.000000e+00> : vector<128xf32>
      %69 = vector.multi_reduction <add>, %68, %cst_47 [0] : vector<16x128xf32> to vector<128xf32>
      %70 = vector.shape_cast %69 : vector<128xf32> to vector<1x128xf32>
      %71 = arith.addf %arg7, %70 : vector<1x128xf32>
      %72 = arith.mulf %68, %68 : vector<16x128xf32>
      %cst_48 = arith.constant dense<0.000000e+00> : vector<128xf32>
      %73 = vector.multi_reduction <add>, %72, %cst_48 [0] : vector<16x128xf32> to vector<128xf32>
      %74 = vector.shape_cast %73 : vector<128xf32> to vector<1x128xf32>
      %75 = arith.addf %arg8, %74 : vector<1x128xf32>
      scf.yield %71, %75 : vector<1x128xf32>, vector<1x128xf32>
    }
    %c16_i32_1 = arith.constant 16 : i32
    %c0 = arith.constant 0 : index
    %c0_2 = arith.constant 0 : index
    %c0_3 = arith.constant 0 : index
    %4 = vector.load %arg4[%c0, %c0_2, %c0_3] : memref<1x1x128xf32, #tpu.memory_space<vmem>>, vector<1x1x128xf32>
    %5 = vector.shape_cast %4 : vector<1x1x128xf32> to vector<1x128xf32>
    %6 = vector.shape_cast %3#0 : vector<1x128xf32> to vector<1x1x128xf32>
    tpu.vector_store %arg4[%c0, %c0_2, %c0_3], %6 {strides = array<i32>} : memref<1x1x128xf32, #tpu.memory_space<vmem>>, vector<1x1x128xf32>,
    %c0_4 = arith.constant 0 : index
    %c0_5 = arith.constant 0 : index
    %c0_6 = arith.constant 0 : index
    %7 = vector.load %arg5[%c0_4, %c0_5, %c0_6] : memref<1x1x128xf32, #tpu.memory_space<vmem>>, vector<1x1x128xf32>
    %8 = vector.shape_cast %7 : vector<1x1x128xf32> to vector<1x128xf32>
    %9 = vector.shape_cast %3#1 : vector<1x128xf32> to vector<1x1x128xf32>
    tpu.vector_store %arg5[%c0_4, %c0_5, %c0_6], %9 {strides = array<i32>} : memref<1x1x128xf32, #tpu.memory_space<vmem>>, vector<1x1x128xf32>,
    return
  }
  func.func @transform_0(%arg0: i32, %arg1: i32) -> (i32, i32, i32, i32) {
    %c0_i32 = arith.constant 0 : i32
    %c0_i32_0 = arith.constant 0 : i32
    %c0_i32_1 = arith.constant 0 : i32
    %c0_i32_2 = arith.constant 0 : i32
    return %arg0, %c0_i32, %c0_i32_0, %c0_i32_1 : i32, i32, i32, i32
  }
  func.func @transform_1(%arg0: i32, %arg1: i32) -> (i32, i32, i32) {
    %c0_i32 = arith.constant 0 : i32
    %c0_i32_0 = arith.constant 0 : i32
    %c0_i32_1 = arith.constant 0 : i32
    %c0_i32_2 = arith.constant 0 : i32
    return %c0_i32, %c0_i32_0, %c0_i32_1 : i32, i32, i32
  }
  func.func @transform_2(%arg0: i32, %arg1: i32) -> (i32, i32, i32) {
    %c1_i32 = arith.constant 1 : i32
    %0 = arith.muli %arg0, %c1_i32 : i32
    %1 = arith.addi %0, %arg1 : i32
    %c0_i32 = arith.constant 0 : i32
    %c0_i32_0 = arith.constant 0 : i32
    %c0_i32_1 = arith.constant 0 : i32
    return %1, %c0_i32, %c0_i32_0 : i32, i32, i32
  }
  func.func @transform_3(%arg0: i32, %arg1: i32) -> (i32, i32, i32) {
    %c1_i32 = arith.constant 1 : i32
    %0 = arith.muli %arg0, %c1_i32 : i32
    %1 = arith.addi %0, %arg1 : i32
    %c0_i32 = arith.constant 0 : i32
    %c0_i32_0 = arith.constant 0 : i32
    %c0_i32_1 = arith.constant 0 : i32
    return %1, %c0_i32, %c0_i32_0 : i32, i32, i32
  }
}

module attributes {stable_mosaic.version = 11 : i64} {
  func.func @apply_kernel(%arg0: i32, %arg1: i32, %arg2: memref<1x18x18x4xbf16, #tpu.memory_space<vmem>>, %arg3: memref<9x4x128xbf16, #tpu.memory_space<vmem>>, %arg4: memref<1x128xf32, #tpu.memory_space<vmem>>, %arg5: memref<1x128xf32, #tpu.memory_space<vmem>>, %arg6: memref<1x16x16x128xf32, #tpu.memory_space<vmem>>) attributes {dimension_semantics = [#tpu.dimension_semantics<parallel>, #tpu.dimension_semantics<parallel>], iteration_bounds = array<i64: 2, 1>, scalar_prefetch = 0 : i64, scratch_operands = 0 : i64, tpu.core_type = #tpu.core_type<tc>, window_params = [{transform_indices = @transform_0, window_bounds = array<i64: 1, 18, 18, 4>}, {pipeline_mode = #tpu.pipeline_mode<synchronous>, transform_indices = @transform_1, window_bounds = array<i64: 9, 4, 128>}, {pipeline_mode = #tpu.pipeline_mode<synchronous>, transform_indices = @transform_2, window_bounds = array<i64: 1, 128>}, {pipeline_mode = #tpu.pipeline_mode<synchronous>, transform_indices = @transform_3, window_bounds = array<i64: 1, 128>}, {transform_indices = @transform_4, window_bounds = array<i64: 1, 16, 16, 128>}]} {
    %c16_i32 = arith.constant 16 : i32
    %0 = arith.muli %arg1, %c16_i32 : i32
    %c0 = arith.constant 0 : index
    %c0_0 = arith.constant 0 : index
    %1 = vector.load %arg4[%c0, %c0_0] : memref<1x128xf32, #tpu.memory_space<vmem>>, vector<1x128xf32>
    %c0_1 = arith.constant 0 : index
    %c0_2 = arith.constant 0 : index
    %2 = vector.load %arg5[%c0_1, %c0_2] : memref<1x128xf32, #tpu.memory_space<vmem>>, vector<1x128xf32>
    %c0_i32 = arith.constant 0 : i32
    %c16_i32_3 = arith.constant 16 : i32
    %3 = arith.addi %c0_i32, %c16_i32_3 : i32
    %c1_i32 = arith.constant 1 : i32
    scf.for %arg7 = %c0_i32 to %3 step %c1_i32  : i32 {
      %4 = arith.addi %0, %arg7 : i32
      %cst = arith.constant 0.000000e+00 : f32
      %5 = vector.broadcast %cst : f32 to vector<16x128xf32>
      %c0_i32_5 = arith.constant 0 : i32
      %6 = arith.addi %4, %c0_i32_5 : i32
      %c0_6 = arith.constant 0 : index
      %7 = arith.index_cast %6 : i32 to index
      %c0_7 = arith.constant 0 : index
      %c0_8 = arith.constant 0 : index
      %8 = vector.load %arg2[%c0_6, %7, %c0_7, %c0_8] : memref<1x18x18x4xbf16, #tpu.memory_space<vmem>>, vector<1x1x18x4xbf16>
      %9 = vector.shape_cast %8 : vector<1x1x18x4xbf16> to vector<18x4xbf16>
      %10 = vector.extract_strided_slice %9 {offsets = [0, 0], sizes = [16, 4], strides = [1, 1]} : vector<18x4xbf16> to vector<16x4xbf16>
      %c0_9 = arith.constant 0 : index
      %c0_10 = arith.constant 0 : index
      %c0_11 = arith.constant 0 : index
      %11 = vector.load %arg3[%c0_9, %c0_10, %c0_11] : memref<9x4x128xbf16, #tpu.memory_space<vmem>>, vector<1x4x128xbf16>
      %12 = vector.shape_cast %11 : vector<1x4x128xbf16> to vector<4x128xbf16>
      %cst_12 = arith.constant dense<0.000000e+00> : vector<16x128xf32>
      %13 = tpu.matmul %10, %12, %cst_12 {dimension_numbers = #tpu.dot_dimension_numbers<[1], [0], [0], [1], [0, 0, 1, 1], [], []>} : vector<16x4xbf16>, vector<4x128xbf16>, vector<16x128xf32> -> vector<16x128xf32>
      %14 = arith.addf %5, %13 : vector<16x128xf32>
      %15 = vector.extract_strided_slice %9 {offsets = [1, 0], sizes = [16, 4], strides = [1, 1]} : vector<18x4xbf16> to vector<16x4xbf16>
      %c1 = arith.constant 1 : index
      %c0_13 = arith.constant 0 : index
      %c0_14 = arith.constant 0 : index
      %16 = vector.load %arg3[%c1, %c0_13, %c0_14] : memref<9x4x128xbf16, #tpu.memory_space<vmem>>, vector<1x4x128xbf16>
      %17 = vector.shape_cast %16 : vector<1x4x128xbf16> to vector<4x128xbf16>
      %cst_15 = arith.constant dense<0.000000e+00> : vector<16x128xf32>
      %18 = tpu.matmul %15, %17, %cst_15 {dimension_numbers = #tpu.dot_dimension_numbers<[1], [0], [0], [1], [0, 0, 1, 1], [], []>} : vector<16x4xbf16>, vector<4x128xbf16>, vector<16x128xf32> -> vector<16x128xf32>
      %19 = arith.addf %14, %18 : vector<16x128xf32>
      %20 = vector.extract_strided_slice %9 {offsets = [2, 0], sizes = [16, 4], strides = [1, 1]} : vector<18x4xbf16> to vector<16x4xbf16>
      %c2 = arith.constant 2 : index
      %c0_16 = arith.constant 0 : index
      %c0_17 = arith.constant 0 : index
      %21 = vector.load %arg3[%c2, %c0_16, %c0_17] : memref<9x4x128xbf16, #tpu.memory_space<vmem>>, vector<1x4x128xbf16>
      %22 = vector.shape_cast %21 : vector<1x4x128xbf16> to vector<4x128xbf16>
      %cst_18 = arith.constant dense<0.000000e+00> : vector<16x128xf32>
      %23 = tpu.matmul %20, %22, %cst_18 {dimension_numbers = #tpu.dot_dimension_numbers<[1], [0], [0], [1], [0, 0, 1, 1], [], []>} : vector<16x4xbf16>, vector<4x128xbf16>, vector<16x128xf32> -> vector<16x128xf32>
      %24 = arith.addf %19, %23 : vector<16x128xf32>
      %c1_i32_19 = arith.constant 1 : i32
      %25 = arith.addi %4, %c1_i32_19 : i32
      %c0_20 = arith.constant 0 : index
      %26 = arith.index_cast %25 : i32 to index
      %c0_21 = arith.constant 0 : index
      %c0_22 = arith.constant 0 : index
      %27 = vector.load %arg2[%c0_20, %26, %c0_21, %c0_22] : memref<1x18x18x4xbf16, #tpu.memory_space<vmem>>, vector<1x1x18x4xbf16>
      %28 = vector.shape_cast %27 : vector<1x1x18x4xbf16> to vector<18x4xbf16>
      %29 = vector.extract_strided_slice %28 {offsets = [0, 0], sizes = [16, 4], strides = [1, 1]} : vector<18x4xbf16> to vector<16x4xbf16>
      %c3 = arith.constant 3 : index
      %c0_23 = arith.constant 0 : index
      %c0_24 = arith.constant 0 : index
      %30 = vector.load %arg3[%c3, %c0_23, %c0_24] : memref<9x4x128xbf16, #tpu.memory_space<vmem>>, vector<1x4x128xbf16>
      %31 = vector.shape_cast %30 : vector<1x4x128xbf16> to vector<4x128xbf16>
      %cst_25 = arith.constant dense<0.000000e+00> : vector<16x128xf32>
      %32 = tpu.matmul %29, %31, %cst_25 {dimension_numbers = #tpu.dot_dimension_numbers<[1], [0], [0], [1], [0, 0, 1, 1], [], []>} : vector<16x4xbf16>, vector<4x128xbf16>, vector<16x128xf32> -> vector<16x128xf32>
      %33 = arith.addf %24, %32 : vector<16x128xf32>
      %34 = vector.extract_strided_slice %28 {offsets = [1, 0], sizes = [16, 4], strides = [1, 1]} : vector<18x4xbf16> to vector<16x4xbf16>
      %c4 = arith.constant 4 : index
      %c0_26 = arith.constant 0 : index
      %c0_27 = arith.constant 0 : index
      %35 = vector.load %arg3[%c4, %c0_26, %c0_27] : memref<9x4x128xbf16, #tpu.memory_space<vmem>>, vector<1x4x128xbf16>
      %36 = vector.shape_cast %35 : vector<1x4x128xbf16> to vector<4x128xbf16>
      %cst_28 = arith.constant dense<0.000000e+00> : vector<16x128xf32>
      %37 = tpu.matmul %34, %36, %cst_28 {dimension_numbers = #tpu.dot_dimension_numbers<[1], [0], [0], [1], [0, 0, 1, 1], [], []>} : vector<16x4xbf16>, vector<4x128xbf16>, vector<16x128xf32> -> vector<16x128xf32>
      %38 = arith.addf %33, %37 : vector<16x128xf32>
      %39 = vector.extract_strided_slice %28 {offsets = [2, 0], sizes = [16, 4], strides = [1, 1]} : vector<18x4xbf16> to vector<16x4xbf16>
      %c5 = arith.constant 5 : index
      %c0_29 = arith.constant 0 : index
      %c0_30 = arith.constant 0 : index
      %40 = vector.load %arg3[%c5, %c0_29, %c0_30] : memref<9x4x128xbf16, #tpu.memory_space<vmem>>, vector<1x4x128xbf16>
      %41 = vector.shape_cast %40 : vector<1x4x128xbf16> to vector<4x128xbf16>
      %cst_31 = arith.constant dense<0.000000e+00> : vector<16x128xf32>
      %42 = tpu.matmul %39, %41, %cst_31 {dimension_numbers = #tpu.dot_dimension_numbers<[1], [0], [0], [1], [0, 0, 1, 1], [], []>} : vector<16x4xbf16>, vector<4x128xbf16>, vector<16x128xf32> -> vector<16x128xf32>
      %43 = arith.addf %38, %42 : vector<16x128xf32>
      %c2_i32 = arith.constant 2 : i32
      %44 = arith.addi %4, %c2_i32 : i32
      %c0_32 = arith.constant 0 : index
      %45 = arith.index_cast %44 : i32 to index
      %c0_33 = arith.constant 0 : index
      %c0_34 = arith.constant 0 : index
      %46 = vector.load %arg2[%c0_32, %45, %c0_33, %c0_34] : memref<1x18x18x4xbf16, #tpu.memory_space<vmem>>, vector<1x1x18x4xbf16>
      %47 = vector.shape_cast %46 : vector<1x1x18x4xbf16> to vector<18x4xbf16>
      %48 = vector.extract_strided_slice %47 {offsets = [0, 0], sizes = [16, 4], strides = [1, 1]} : vector<18x4xbf16> to vector<16x4xbf16>
      %c6 = arith.constant 6 : index
      %c0_35 = arith.constant 0 : index
      %c0_36 = arith.constant 0 : index
      %49 = vector.load %arg3[%c6, %c0_35, %c0_36] : memref<9x4x128xbf16, #tpu.memory_space<vmem>>, vector<1x4x128xbf16>
      %50 = vector.shape_cast %49 : vector<1x4x128xbf16> to vector<4x128xbf16>
      %cst_37 = arith.constant dense<0.000000e+00> : vector<16x128xf32>
      %51 = tpu.matmul %48, %50, %cst_37 {dimension_numbers = #tpu.dot_dimension_numbers<[1], [0], [0], [1], [0, 0, 1, 1], [], []>} : vector<16x4xbf16>, vector<4x128xbf16>, vector<16x128xf32> -> vector<16x128xf32>
      %52 = arith.addf %43, %51 : vector<16x128xf32>
      %53 = vector.extract_strided_slice %47 {offsets = [1, 0], sizes = [16, 4], strides = [1, 1]} : vector<18x4xbf16> to vector<16x4xbf16>
      %c7 = arith.constant 7 : index
      %c0_38 = arith.constant 0 : index
      %c0_39 = arith.constant 0 : index
      %54 = vector.load %arg3[%c7, %c0_38, %c0_39] : memref<9x4x128xbf16, #tpu.memory_space<vmem>>, vector<1x4x128xbf16>
      %55 = vector.shape_cast %54 : vector<1x4x128xbf16> to vector<4x128xbf16>
      %cst_40 = arith.constant dense<0.000000e+00> : vector<16x128xf32>
      %56 = tpu.matmul %53, %55, %cst_40 {dimension_numbers = #tpu.dot_dimension_numbers<[1], [0], [0], [1], [0, 0, 1, 1], [], []>} : vector<16x4xbf16>, vector<4x128xbf16>, vector<16x128xf32> -> vector<16x128xf32>
      %57 = arith.addf %52, %56 : vector<16x128xf32>
      %58 = vector.extract_strided_slice %47 {offsets = [2, 0], sizes = [16, 4], strides = [1, 1]} : vector<18x4xbf16> to vector<16x4xbf16>
      %c8 = arith.constant 8 : index
      %c0_41 = arith.constant 0 : index
      %c0_42 = arith.constant 0 : index
      %59 = vector.load %arg3[%c8, %c0_41, %c0_42] : memref<9x4x128xbf16, #tpu.memory_space<vmem>>, vector<1x4x128xbf16>
      %60 = vector.shape_cast %59 : vector<1x4x128xbf16> to vector<4x128xbf16>
      %cst_43 = arith.constant dense<0.000000e+00> : vector<16x128xf32>
      %61 = tpu.matmul %58, %60, %cst_43 {dimension_numbers = #tpu.dot_dimension_numbers<[1], [0], [0], [1], [0, 0, 1, 1], [], []>} : vector<16x4xbf16>, vector<4x128xbf16>, vector<16x128xf32> -> vector<16x128xf32>
      %62 = arith.addf %57, %61 : vector<16x128xf32>
      %63 = vector.broadcast %1 : vector<1x128xf32> to vector<16x128xf32>
      %64 = arith.mulf %62, %63 : vector<16x128xf32>
      %65 = vector.broadcast %2 : vector<1x128xf32> to vector<16x128xf32>
      %66 = arith.addf %64, %65 : vector<16x128xf32>
      %cst_44 = arith.constant 0.000000e+00 : f32
      %67 = vector.broadcast %cst_44 : f32 to vector<16x128xf32>
      %68 = arith.maximumf %66, %67 : vector<16x128xf32>
      %c0_45 = arith.constant 0 : index
      %69 = arith.index_cast %arg7 : i32 to index
      %c0_46 = arith.constant 0 : index
      %c0_47 = arith.constant 0 : index
      %70 = vector.load %arg6[%c0_45, %69, %c0_46, %c0_47] : memref<1x16x16x128xf32, #tpu.memory_space<vmem>>, vector<1x1x16x128xf32>
      %71 = vector.shape_cast %70 : vector<1x1x16x128xf32> to vector<16x128xf32>
      %72 = vector.shape_cast %68 : vector<16x128xf32> to vector<1x1x16x128xf32>
      tpu.vector_store %arg6[%c0_45, %69, %c0_46, %c0_47], %72 {strides = array<i32>} : memref<1x16x16x128xf32, #tpu.memory_space<vmem>>, vector<1x1x16x128xf32>,
    }
    %c16_i32_4 = arith.constant 16 : i32
    return
  }
  func.func @transform_0(%arg0: i32, %arg1: i32) -> (i32, i32, i32, i32) {
    %c0_i32 = arith.constant 0 : i32
    %c0_i32_0 = arith.constant 0 : i32
    %c0_i32_1 = arith.constant 0 : i32
    %c0_i32_2 = arith.constant 0 : i32
    return %arg0, %c0_i32, %c0_i32_0, %c0_i32_1 : i32, i32, i32, i32
  }
  func.func @transform_1(%arg0: i32, %arg1: i32) -> (i32, i32, i32) {
    %c0_i32 = arith.constant 0 : i32
    %c0_i32_0 = arith.constant 0 : i32
    %c0_i32_1 = arith.constant 0 : i32
    %c0_i32_2 = arith.constant 0 : i32
    return %c0_i32, %c0_i32_0, %c0_i32_1 : i32, i32, i32
  }
  func.func @transform_2(%arg0: i32, %arg1: i32) -> (i32, i32) {
    %c0_i32 = arith.constant 0 : i32
    %c0_i32_0 = arith.constant 0 : i32
    %c0_i32_1 = arith.constant 0 : i32
    return %c0_i32, %c0_i32_0 : i32, i32
  }
  func.func @transform_3(%arg0: i32, %arg1: i32) -> (i32, i32) {
    %c0_i32 = arith.constant 0 : i32
    %c0_i32_0 = arith.constant 0 : i32
    %c0_i32_1 = arith.constant 0 : i32
    return %c0_i32, %c0_i32_0 : i32, i32
  }
  func.func @transform_4(%arg0: i32, %arg1: i32) -> (i32, i32, i32, i32) {
    %c0_i32 = arith.constant 0 : i32
    %c0_i32_0 = arith.constant 0 : i32
    %c0_i32_1 = arith.constant 0 : i32
    return %arg0, %arg1, %c0_i32, %c0_i32_0 : i32, i32, i32, i32
  }
}

</mosaic_0001>

<llo_original>
// kernel: conv_bn_relu.3
$region0: #{conv_bn_relu.3}
  #allocation0 [shape = 'u32[]', space=smem, size = 0x4, offset = 0x4, fixed_abs, tag = 'smem constant byte address 0x4 - core index']
  #allocation1 [shape = 'u32[144,128]{1,0:T(1,128)}', space=vmem, size = 0x12000, scoped, tag = 'internal scratch']
  %s0 = inlined_call_operand.vmem [shape: bf16[2,18,18,4], index: 0, kind: input, shape index: {}]
  %s1 = inlined_call_operand.vmem [shape: bf16[9,4,128], index: 1, kind: input, shape index: {}]
  %s2 = inlined_call_operand.vmem [shape: f32[1,128], index: 2, kind: input, shape index: {}]
  %s3 = inlined_call_operand.vmem [shape: f32[1,128], index: 3, kind: input, shape index: {}]
  %s4 = inlined_call_operand.vmem [shape: f32[2,16,16,128], index: 4, kind: output, shape index: {}]
  %s5 = sld [smem:[#allocation0]]
  $region56: #{conv_bn_relu.3} parent=0
    _
  %s7 = ssub.s32 1, %s5
  %s8 = scalar_select 0, %s7, %s5
  loop: start=0, step=1, limit=4
  $region2: #{conv_bn_relu.3} parent=0 // loop_pre_header
    _
  $region3: #{conv_bn_relu.3} parent=0 // loop_header
    %s10 = sphi 0, %s14
    %p11 = scmp.ge.s32.totalorder %s10, 4
    %s17 = sphi 0, %s29
    %s18 = sphi 0, %s25
    %s19 = sphi 0, %s17
    %s20 = sphi 0, %s18
    %s21 = sphi 0, %s19
    %s22 = sphi 0, %s20
    %s32 = sphi 0, %s34
    %s35 = sphi 0, %s32
    %s36 = sphi 0, %s35
    %s52 = sphi 0, %s36
    %s56 = sphi 0, %s56
    %s58 = sphi 0, %s56
    %s59 = sphi 0, %s58
    %s73 = sphi 0, %s59
    %s77 = sphi 0, %s77
    %s79 = sphi 0, %s77
    %s80 = sphi 0, %s79
    %s94 = sphi 0, %s80
    %s98 = sphi 0, %s98
    %s100 = sphi 0, %s98
    %s101 = sphi 0, %s100
    %s115 = sphi 0, %s101
    %s123 = sphi 0, %s125
    %s126 = sphi 0, %s123
    %s127 = sphi 0, %s126
    %s143 = sphi 0, %s127
  $region4: #{conv_bn_relu.3} parent=0 // loop_header_branch
    %13 = sbr.rel (%p11) target = $region8
  $region5: #{conv_bn_relu.3} parent=0 // loop_body
    %s15 = ssub.s32 %s10, 1
    %s16 = ssub.s32 %s10, 2
    %s23 = sadd.s32 1, %s18
    %p24 = scmp.ge.s32.totalorder %s23, 1
    %s25 = scalar_select %p24, 0, %s23
    %s26 = sadd.s32 1, %s17
    %s27 = scalar_select %p24, %s26, %s17
    %p28 = scmp.ge.s32.totalorder %s27, 2
    %s29 = scalar_select %p28, 0, %s27
    %s30 = ssub.s32 %s17, %s29
    %p31 = scmp.eq.s32.totalorder %s30, 0
    %s33 = sadd.s32 %s32, 1
    %s34 = scalar_select %p31, %s32, %s33
    %p37 = pneg %p31
    %p38 = scmp.eq.s32.totalorder %s10, 1
    %p39 = por %p37, %p38
    %p40 = scmp.ne.s32.totalorder %s32, %s35
    %p41 = scmp.eq.s32.totalorder %s10, 0
    %p42 = por %p40, %p41
    %p43 = scmp.ne.s32.totalorder %s32, %s35
    %p44 = scmp.eq.s32.totalorder %s15, 1
    %p45 = por %p43, %p44
    %p46 = scmp.ne.s32.totalorder %s35, %s36
    %p47 = scmp.eq.s32.totalorder %s15, 0
    %p48 = por %p46, %p47
    %p49 = scmp.ne.s32.totalorder %s35, %s36
    %p50 = scmp.eq.s32.totalorder %s16, 1
    %p51 = por %p49, %p50
    %p53 = scmp.ne.s32.totalorder %s36, %s52
    %p54 = scmp.eq.s32.totalorder %s16, 0
    %p55 = por %p53, %p54
    %s57 = sadd.s32 %s56, 1
    %p60 = scmp.eq.s32.totalorder %s10, 1
    %p61 = scmp.ne.s32.totalorder %s56, %s58
    %p62 = scmp.eq.s32.totalorder %s10, 0
    %p63 = por %p61, %p62
    %p64 = scmp.ne.s32.totalorder %s56, %s58
    %p65 = scmp.eq.s32.totalorder %s15, 1
    %p66 = por %p64, %p65
    %p67 = scmp.ne.s32.totalorder %s58, %s59
    %p68 = scmp.eq.s32.totalorder %s15, 0
    %p69 = por %p67, %p68
    %p70 = scmp.ne.s32.totalorder %s58, %s59
    %p71 = scmp.eq.s32.totalorder %s16, 1
    %p72 = por %p70, %p71
    %p74 = scmp.ne.s32.totalorder %s59, %s73
    %p75 = scmp.eq.s32.totalorder %s16, 0
    %p76 = por %p74, %p75
    %s78 = sadd.s32 %s77, 1
    %p81 = scmp.eq.s32.totalorder %s10, 1
    %p82 = scmp.ne.s32.totalorder %s77, %s79
    %p83 = scmp.eq.s32.totalorder %s10, 0
    %p84 = por %p82, %p83
    %p85 = scmp.ne.s32.totalorder %s77, %s79
    %p86 = scmp.eq.s32.totalorder %s15, 1
    %p87 = por %p85, %p86
    %p88 = scmp.ne.s32.totalorder %s79, %s80
    %p89 = scmp.eq.s32.totalorder %s15, 0
    %p90 = por %p88, %p89
    %p91 = scmp.ne.s32.totalorder %s79, %s80
    %p92 = scmp.eq.s32.totalorder %s16, 1
    %p93 = por %p91, %p92
    %p95 = scmp.ne.s32.totalorder %s80, %s94
    %p96 = scmp.eq.s32.totalorder %s16, 0
    %p97 = por %p95, %p96
    %s99 = sadd.s32 %s98, 1
    %p102 = scmp.eq.s32.totalorder %s10, 1
    %p103 = scmp.ne.s32.totalorder %s98, %s100
    %p104 = scmp.eq.s32.totalorder %s10, 0
    %p105 = por %p103, %p104
    %p106 = scmp.ne.s32.totalorder %s98, %s100
    %p107 = scmp.eq.s32.totalorder %s15, 1
    %p108 = por %p106, %p107
    %p109 = scmp.ne.s32.totalorder %s100, %s101
    %p110 = scmp.eq.s32.totalorder %s15, 0
    %p111 = por %p109, %p110
    %p112 = scmp.ne.s32.totalorder %s100, %s101
    %p113 = scmp.eq.s32.totalorder %s16, 1
    %p114 = por %p112, %p113
    %p116 = scmp.ne.s32.totalorder %s101, %s115
    %p117 = scmp.eq.s32.totalorder %s16, 0
    %p118 = por %p116, %p117
    %s119 = ssub.s32 %s17, %s29
    %s120 = ssub.s32 %s18, %s25
    %s121 = sor.u32 %s119, %s120
    %p122 = scmp.eq.s32.totalorder %s121, 0
    %s124 = sadd.s32 %s123, 1
    %s125 = scalar_select %p122, %s123, %s124
    %p128 = pneg %p122
    %p129 = scmp.eq.s32.totalorder %s10, 1
    %p130 = por %p128, %p129
    %p131 = scmp.ne.s32.totalorder %s123, %s126
    %p132 = scmp.eq.s32.totalorder %s10, 0
    %p133 = por %p131, %p132
    %p134 = scmp.ne.s32.totalorder %s123, %s126
    %p135 = scmp.eq.s32.totalorder %s15, 1
    %p136 = por %p134, %p135
    %p137 = scmp.ne.s32.totalorder %s126, %s127
    %p138 = scmp.eq.s32.totalorder %s15, 0
    %p139 = por %p137, %p138
    %p140 = scmp.ne.s32.totalorder %s126, %s127
    %p141 = scmp.eq.s32.totalorder %s16, 1
    %p142 = por %p140, %p141
    %p144 = scmp.ne.s32.totalorder %s127, %s143
    %p145 = scmp.eq.s32.totalorder %s16, 0
    %p146 = por %p144, %p145
    %p147 = scmp.le.s32.totalorder 1, %s10
    %p148 = scmp.lt.s32.totalorder %s10, 3
    %p149 = pnand %p147, %p148
    %p150 = pneg %p149
    // Predicated region
    $region9: #{conv_bn_relu.3} parent=5 // pred_check
      _
    $region10: #{conv_bn_relu.3} parent=5 // pred_check_branch
      %152 = sbr.rel (%p149) target = $region12
    $region11: #{conv_bn_relu.3} parent=5 // pred_region
      %s153 = ssub.s32 %s10, 1
      // Predicated region
      $region13: #{conv_bn_relu.3} parent=11 // pred_check
        %p154 = pneg %p69
      $region14: #{conv_bn_relu.3} parent=11 // pred_check_branch
        %156 = sbr.rel (%p154) target = $region16
      $region15: #{conv_bn_relu.3} parent=11 // pred_region
        _
      $region16: #{conv_bn_relu.3} parent=11 // pred_fallthru
        _
      // Predicated region
      $region17: #{conv_bn_relu.3} parent=11 // pred_check
        %p157 = pneg %p90
      $region18: #{conv_bn_relu.3} parent=11 // pred_check_branch
        %159 = sbr.rel (%p157) target = $region20
      $region19: #{conv_bn_relu.3} parent=11 // pred_region
        _
      $region20: #{conv_bn_relu.3} parent=11 // pred_fallthru
        _
      // Predicated region
      $region21: #{conv_bn_relu.3} parent=11 // pred_check
        %p160 = pneg %p111
      $region22: #{conv_bn_relu.3} parent=11 // pred_check_branch
        %162 = sbr.rel (%p160) target = $region24
      $region23: #{conv_bn_relu.3} parent=11 // pred_region
        _
      $region24: #{conv_bn_relu.3} parent=11 // pred_fallthru
        _
    $region12: #{conv_bn_relu.3} parent=5 // pred_fallthru
      _
    %p163 = scmp.lt.s32.totalorder %s10, 2
    // Predicated region
    $region25: #{conv_bn_relu.3} parent=5 // pred_check
      %p164 = pneg %p163
    $region26: #{conv_bn_relu.3} parent=5 // pred_check_branch
      %166 = sbr.rel (%p164) target = $region28
    $region27: #{conv_bn_relu.3} parent=5 // pred_region
      // Predicated region
      $region29: #{conv_bn_relu.3} parent=27 // pred_check
        %p167 = pneg %p42
      $region30: #{conv_bn_relu.3} parent=27 // pred_check_branch
        %169 = sbr.rel (%p167) target = $region32
      $region31: #{conv_bn_relu.3} parent=27 // pred_region
        %p170 = scmp.lt.s32.totalorder %s17, 1
        %s171 = scalar_select %p170, %s17, 1
        %s172 = smul.addr %s171, 54
        %s173 = smul.addr %s172, 4
        %s174 = scalar_lea.vmem %s0, %s173
      $region32: #{conv_bn_relu.3} parent=27 // pred_fallthru
        _
    $region28: #{conv_bn_relu.3} parent=5 // pred_fallthru
      _
    %p175 = scmp.le.s32.totalorder 1, %s10
    %p176 = scmp.lt.s32.totalorder %s10, 3
    %p177 = pnand %p175, %p176
    %p178 = pneg %p177
    // Predicated region
    $region33: #{conv_bn_relu.3} parent=5 // pred_check
      _
    $region34: #{conv_bn_relu.3} parent=5 // pred_check_branch
      %180 = sbr.rel (%p177) target = $region36
    $region35: #{conv_bn_relu.3} parent=5 // pred_region
      %s181 = ssub.s32 %s10, 1
      %p182 = scmp.lt.s32.totalorder %s19, 1
      %s183 = scalar_select %p182, %s19, 1
      %s184 = smul.addr %s183, 54
      %s185 = smul.addr %s184, 4
      %s186 = scalar_lea.vmem %s0, %s185
      %p187 = pneg %p48
      %p188 = pneg %p45
      %p189 = pneg %p69
      %p190 = pneg %p66
      %p191 = pneg %p90
      %p192 = pneg %p87
      %p193 = pneg %p111
      %p194 = pneg %p108
      %p195 = pneg %p139
      %p196 = pneg %p136
      %s197 = smul.u32 16, %s20
      %p198 = scmp.lt.s32.totalorder %s19, 1
      %s199 = scalar_select %p198, %s19, 1
      %p200 = scmp.lt.s32.totalorder %s197, 15
      %s201 = scalar_select %p200, %s197, 15
      %s202 = smul.addr %s201, 2
      %s203 = smul.addr %s199, 32
      %s204 = sadd.s32 %s202, %s203
      %s205 = smul.addr %s204, 8
      %s206 = scalar_lea.vmem %s4, %s205
      %p207 = scmp.lt.s32.totalorder %s19, 1
      %s208 = scalar_select %p207, %s19, 1
      %s209 = smul.addr %s208, 54
      %s210 = smul.addr %s209, 4
      %s211 = scalar_lea.vmem %s0, %s210
      %s212 = smul.u32 16, %s20
      %p213 = scmp.lt.s32.totalorder %s19, 1
      %s214 = scalar_select %p213, %s19, 1
      %p215 = scmp.lt.s32.totalorder %s212, 15
      %s216 = scalar_select %p215, %s212, 15
      %s217 = smul.addr %s216, 2
      %s218 = smul.addr %s214, 32
      %s219 = sadd.s32 %s217, %s218
      %s220 = smul.addr %s219, 8
      %s221 = scalar_lea.vmem %s4, %s220
      %s222 = smul.u32 16, %s20
      %s224 = smul.u32 %s20, 16
      %v225 = vld [vmem:[%s2] sm:$0x1]
      %v226 = vld [vmem:[%s3] sm:$0x1]
      loop: start=0, step=1, limit=16
      $region37: #{conv_bn_relu.3} parent=35 // loop_pre_header
        _
      $region38: #{conv_bn_relu.3} parent=35 // loop_header
        %s228 = sphi 0, %s232
        %p229 = scmp.ge.s32.totalorder %s228, 16
      $region39: #{conv_bn_relu.3} parent=35 // loop_header_branch
        %231 = sbr.rel (%p229) target = $region43
      $region40: #{conv_bn_relu.3} parent=35 // loop_body
        %s233 = sadd.s32 %s224, %s228
        %s234 = smul.u32 %s233, 3
        %s235 = smul.addr %s234, 4
        %s236 = scalar_lea.vmem %s211, %s235
        %v237 = vld [vmem:[%s236] sm:$0xf]
        %v238 = vld [vmem:[%s236 + $0x4] sm:$0xf]
        %v239 = vld [vmem:[%s236 + $0x8] sm:$0x1]
        %v240 = vld [vmem:[%s1] sm:$0x3]
        %s241 = scalar_lea.vmem %s1, 2
        %v242 = vld [vmem:[%s241] sm:$0x3]
        %v246 = vunpack.c.l.b16 %v237
        %v247 = vunpack.c.l.b16 %v238
        %v248 = vunpack.c.l.b16 %v239
        %v249 = vpack.c.b16 %v247, %v246
        %v250 = vpack.c.b16 %v248, %v248
        %vm251 = vsmask.f32 7424
        %v253 = vshrl.u32 %v249, 16
        %v255 = vshll.u32 %v249, 16
        %v257 = vrot.slane %v255, 1
        %v258 = vor.u32 %v253, %v257
        %v260 = vshll.u32 %v250, 16
        %v262 = vrot.slane %v260, 1
        %v263 = vsel %vm251, %v258, %v262
        %vm264 = vcmask 31744
        %v266 = vsel %vm264, %v263, 0
        %vm268 = vcmask 1041408
        %v270 = vsel %vm268, %v242, 0
        %272 = vmatprep.subr.bf16.mxu0 0
        %273 = vmatpush1.bf16.msra.mxu0 %v270
        %274 = vmatprep.subr.bf16.mxu0 0
        %275 = vmatpush1.bf16.msra.mxu0 0
        %276 = vmatprep.subr.bf16.mxu0 0
        %277 = vmatpush1.bf16.msra.mxu0 0
        %278 = vmatprep.subr.bf16.mxu0 0
        %279 = vmatpush1.bf16.msra.mxu0 0
        %280 = vmatprep.subr.bf16.mxu0 0
        %281 = vmatpush1.bf16.msra.mxu0 0
        %282 = vmatprep.subr.bf16.mxu0 0
        %283 = vmatpush1.bf16.msra.mxu0 0
        %284 = vmatprep.subr.bf16.mxu0 0
        %285 = vmatpush1.bf16.msra.mxu0 0
        %286 = vmatprep.subr.bf16.mxu0 0
        %287 = vmatpush1.bf16.msra.mxu0 0
        %288 = vmatprep.subr.bf16.mxu0 0
        %289 = vmatpush1.bf16.msra.mxu0 0
        %290 = vmatprep.subr.bf16.mxu0 0
        %291 = vmatpush1.bf16.msra.mxu0 0
        %292 = vmatprep.subr.bf16.mxu0 0
        %293 = vmatpush1.bf16.msra.mxu0 0
        %294 = vmatprep.subr.bf16.mxu0 0
        %295 = vmatpush1.bf16.msra.mxu0 0
        %296 = vmatprep.subr.bf16.mxu0 0
        %297 = vmatpush1.bf16.msra.mxu0 0
        %298 = vmatprep.subr.bf16.mxu0 0
        %299 = vmatpush1.bf16.msra.mxu0 0
        %300 = vmatprep.subr.bf16.mxu0 0
        %301 = vmatpush1.bf16.msra.mxu0 0
        %302 = vmatprep.subr.bf16.mxu0 0
        %303 = vmatpush1.bf16.msra.mxu0 0
        %304 = vmatprep.mubr.bf16.mxu0 0
        %305 = vmatmul.mubr.bf16.gmra.mrb[0].mxu0 %v266
        %v306 = vpop.f32.mrb[0].mxu0
        %v307 = vadd.f32 0.0, %v306
        %v308 = vpop.f32.mrb[0].mxu0
        %v309 = vpop.f32.mrb[0].mxu0
        %v310 = vadd.f32 0.0, %v309
        %v311 = vpop.f32.mrb[0].mxu0
        %312 = vdwg.mxu0
        %v313 = vsel %vm264, %v249, 0
        %v316 = vsel %vm268, %v240, 0
        %318 = vmatprep.subr.bf16.mxu0 0
        %319 = vmatpush1.bf16.msra.mxu0 %v316
        %320 = vmatprep.subr.bf16.mxu0 0
        %321 = vmatpush1.bf16.msra.mxu0 0
        %322 = vmatprep.subr.bf16.mxu0 0
        %323 = vmatpush1.bf16.msra.mxu0 0
        %324 = vmatprep.subr.bf16.mxu0 0
        %325 = vmatpush1.bf16.msra.mxu0 0
        %326 = vmatprep.subr.bf16.mxu0 0
        %327 = vmatpush1.bf16.msra.mxu0 0
        %328 = vmatprep.subr.bf16.mxu0 0
        %329 = vmatpush1.bf16.msra.mxu0 0
        %330 = vmatprep.subr.bf16.mxu0 0
        %331 = vmatpush1.bf16.msra.mxu0 0
        %332 = vmatprep.subr.bf16.mxu0 0
        %333 = vmatpush1.bf16.msra.mxu0 0
        %334 = vmatprep.subr.bf16.mxu0 0
        %335 = vmatpush1.bf16.msra.mxu0 0
        %336 = vmatprep.subr.bf16.mxu0 0
        %337 = vmatpush1.bf16.msra.mxu0 0
        %338 = vmatprep.subr.bf16.mxu0 0
        %339 = vmatpush1.bf16.msra.mxu0 0
        %340 = vmatprep.subr.bf16.mxu0 0
        %341 = vmatpush1.bf16.msra.mxu0 0
        %342 = vmatprep.subr.bf16.mxu0 0
        %343 = vmatpush1.bf16.msra.mxu0 0
        %344 = vmatprep.subr.bf16.mxu0 0
        %345 = vmatpush1.bf16.msra.mxu0 0
        %346 = vmatprep.subr.bf16.mxu0 0
        %347 = vmatpush1.bf16.msra.mxu0 0
        %348 = vmatprep.subr.bf16.mxu0 0
        %349 = vmatpush1.bf16.msra.mxu0 0
        %350 = vmatprep.mubr.bf16.mxu0 0
        %351 = vmatmul.mubr.bf16.gmra.mrb[0].mxu0 %v313
        %v352 = vpop.f32.mrb[0].mxu0
        %v353 = vadd.f32 %v307, %v352
        %v354 = vpop.f32.mrb[0].mxu0
        %v355 = vpop.f32.mrb[0].mxu0
        %v356 = vadd.f32 %v310, %v355
        %v357 = vpop.f32.mrb[0].mxu0
        %358 = vdwg.mxu0
        %s359 = scalar_lea.vmem %s1, 4
        %v360 = vld [vmem:[%s359] sm:$0x3]
        %vm361 = vcmask 1046528
        %v362 = vrot.slane %v249, 1
        %v363 = vrot.slane %v250, 1
        %v364 = vsel %vm361, %v362, %v363
        %v366 = vsel %vm264, %v364, 0
        %v369 = vsel %vm268, %v360, 0
        %371 = vmatprep.subr.bf16.mxu0 0
        %372 = vmatpush1.bf16.msra.mxu0 %v369
        %373 = vmatprep.subr.bf16.mxu0 0
        %374 = vmatpush1.bf16.msra.mxu0 0
        %375 = vmatprep.subr.bf16.mxu0 0
        %376 = vmatpush1.bf16.msra.mxu0 0
        %377 = vmatprep.subr.bf16.mxu0 0
        %378 = vmatpush1.bf16.msra.mxu0 0
        %379 = vmatprep.subr.bf16.mxu0 0
        %380 = vmatpush1.bf16.msra.mxu0 0
        %381 = vmatprep.subr.bf16.mxu0 0
        %382 = vmatpush1.bf16.msra.mxu0 0
        %383 = vmatprep.subr.bf16.mxu0 0
        %384 = vmatpush1.bf16.msra.mxu0 0
        %385 = vmatprep.subr.bf16.mxu0 0
        %386 = vmatpush1.bf16.msra.mxu0 0
        %387 = vmatprep.subr.bf16.mxu0 0
        %388 = vmatpush1.bf16.msra.mxu0 0
        %389 = vmatprep.subr.bf16.mxu0 0
        %390 = vmatpush1.bf16.msra.mxu0 0
        %391 = vmatprep.subr.bf16.mxu0 0
        %392 = vmatpush1.bf16.msra.mxu0 0
        %393 = vmatprep.subr.bf16.mxu0 0
        %394 = vmatpush1.bf16.msra.mxu0 0
        %395 = vmatprep.subr.bf16.mxu0 0
        %396 = vmatpush1.bf16.msra.mxu0 0
        %397 = vmatprep.subr.bf16.mxu0 0
        %398 = vmatpush1.bf16.msra.mxu0 0
        %399 = vmatprep.subr.bf16.mxu0 0
        %400 = vmatpush1.bf16.msra.mxu0 0
        %401 = vmatprep.subr.bf16.mxu0 0
        %402 = vmatpush1.bf16.msra.mxu0 0
        %403 = vmatprep.mubr.bf16.mxu0 0
        %404 = vmatmul.mubr.bf16.gmra.mrb[0].mxu0 %v366
        %v405 = vpop.f32.mrb[0].mxu0
        %v406 = vadd.f32 0.0, %v405
        %v407 = vpop.f32.mrb[0].mxu0
        %v408 = vpop.f32.mrb[0].mxu0
        %v409 = vadd.f32 0.0, %v408
        %v410 = vpop.f32.mrb[0].mxu0
        %411 = vdwg.mxu0
        %v412 = vadd.f32 %v353, %v406
        %v413 = vadd.f32 %v356, %v409
        %s414 = sadd.s32 %s233, 1
        %s415 = smul.u32 %s414, 3
        %s416 = smul.addr %s415, 4
        %s417 = scalar_lea.vmem %s211, %s416
        %v418 = vld [vmem:[%s417] sm:$0xf]
        %v419 = vld [vmem:[%s417 + $0x4] sm:$0xf]
        %v420 = vld [vmem:[%s417 + $0x8] sm:$0x1]
        %s421 = scalar_lea.vmem %s1, 6
        %v422 = vld [vmem:[%s421] sm:$0x3]
        %v425 = vunpack.c.l.b16 %v418
        %v426 = vunpack.c.l.b16 %v419
        %v427 = vpack.c.b16 %v426, %v425
        %v429 = vsel %vm264, %v427, 0
        %v432 = vsel %vm268, %v422, 0
        %434 = vmatprep.subr.bf16.mxu0 0
        %435 = vmatpush1.bf16.msra.mxu0 %v432
        %436 = vmatprep.subr.bf16.mxu0 0
        %437 = vmatpush1.bf16.msra.mxu0 0
        %438 = vmatprep.subr.bf16.mxu0 0
        %439 = vmatpush1.bf16.msra.mxu0 0
        %440 = vmatprep.subr.bf16.mxu0 0
        %441 = vmatpush1.bf16.msra.mxu0 0
        %442 = vmatprep.subr.bf16.mxu0 0
        %443 = vmatpush1.bf16.msra.mxu0 0
        %444 = vmatprep.subr.bf16.mxu0 0
        %445 = vmatpush1.bf16.msra.mxu0 0
        %446 = vmatprep.subr.bf16.mxu0 0
        %447 = vmatpush1.bf16.msra.mxu0 0
        %448 = vmatprep.subr.bf16.mxu0 0
        %449 = vmatpush1.bf16.msra.mxu0 0
        %450 = vmatprep.subr.bf16.mxu0 0
        %451 = vmatpush1.bf16.msra.mxu0 0
        %452 = vmatprep.subr.bf16.mxu0 0
        %453 = vmatpush1.bf16.msra.mxu0 0
        %454 = vmatprep.subr.bf16.mxu0 0
        %455 = vmatpush1.bf16.msra.mxu0 0
        %456 = vmatprep.subr.bf16.mxu0 0
        %457 = vmatpush1.bf16.msra.mxu0 0
        %458 = vmatprep.subr.bf16.mxu0 0
        %459 = vmatpush1.bf16.msra.mxu0 0
        %460 = vmatprep.subr.bf16.mxu0 0
        %461 = vmatpush1.bf16.msra.mxu0 0
        %462 = vmatprep.subr.bf16.mxu0 0
        %463 = vmatpush1.bf16.msra.mxu0 0
        %464 = vmatprep.subr.bf16.mxu0 0
        %465 = vmatpush1.bf16.msra.mxu0 0
        %466 = vmatprep.mubr.bf16.mxu0 0
        %467 = vmatmul.mubr.bf16.gmra.mrb[0].mxu0 %v429
        %v468 = vpop.f32.mrb[0].mxu0
        %v469 = vadd.f32 0.0, %v468
        %v470 = vpop.f32.mrb[0].mxu0
        %v471 = vpop.f32.mrb[0].mxu0
        %v472 = vadd.f32 0.0, %v471
        %v473 = vpop.f32.mrb[0].mxu0
        %474 = vdwg.mxu0
        %v475 = vadd.f32 %v412, %v469
        %v476 = vadd.f32 %v413, %v472
        %s477 = scalar_lea.vmem %s1, 8
        %v478 = vld [vmem:[%s477] sm:$0x3]
        %v480 = vunpack.c.l.b16 %v420
        %v481 = vpack.c.b16 %v480, %v480
        %v482 = vshrl.u32 %v427, 16
        %v484 = vshll.u32 %v427, 16
        %v486 = vrot.slane %v484, 1
        %v487 = vor.u32 %v482, %v486
        %v489 = vshll.u32 %v481, 16
        %v491 = vrot.slane %v489, 1
        %v492 = vsel %vm251, %v487, %v491
        %v494 = vsel %vm264, %v492, 0
        %v497 = vsel %vm268, %v478, 0
        %499 = vmatprep.subr.bf16.mxu0 0
        %500 = vmatpush1.bf16.msra.mxu0 %v497
        %501 = vmatprep.subr.bf16.mxu0 0
        %502 = vmatpush1.bf16.msra.mxu0 0
        %503 = vmatprep.subr.bf16.mxu0 0
        %504 = vmatpush1.bf16.msra.mxu0 0
        %505 = vmatprep.subr.bf16.mxu0 0
        %506 = vmatpush1.bf16.msra.mxu0 0
        %507 = vmatprep.subr.bf16.mxu0 0
        %508 = vmatpush1.bf16.msra.mxu0 0
        %509 = vmatprep.subr.bf16.mxu0 0
        %510 = vmatpush1.bf16.msra.mxu0 0
        %511 = vmatprep.subr.bf16.mxu0 0
        %512 = vmatpush1.bf16.msra.mxu0 0
        %513 = vmatprep.subr.bf16.mxu0 0
        %514 = vmatpush1.bf16.msra.mxu0 0
        %515 = vmatprep.subr.bf16.mxu0 0
        %516 = vmatpush1.bf16.msra.mxu0 0
        %517 = vmatprep.subr.bf16.mxu0 0
        %518 = vmatpush1.bf16.msra.mxu0 0
        %519 = vmatprep.subr.bf16.mxu0 0
        %520 = vmatpush1.bf16.msra.mxu0 0
        %521 = vmatprep.subr.bf16.mxu0 0
        %522 = vmatpush1.bf16.msra.mxu0 0
        %523 = vmatprep.subr.bf16.mxu0 0
        %524 = vmatpush1.bf16.msra.mxu0 0
        %525 = vmatprep.subr.bf16.mxu0 0
        %526 = vmatpush1.bf16.msra.mxu0 0
        %527 = vmatprep.subr.bf16.mxu0 0
        %528 = vmatpush1.bf16.msra.mxu0 0
        %529 = vmatprep.subr.bf16.mxu0 0
        %530 = vmatpush1.bf16.msra.mxu0 0
        %531 = vmatprep.mubr.bf16.mxu0 0
        %532 = vmatmul.mubr.bf16.gmra.mrb[0].mxu0 %v494
        %v533 = vpop.f32.mrb[0].mxu0
        %v534 = vadd.f32 0.0, %v533
        %v535 = vpop.f32.mrb[0].mxu0
        %v536 = vpop.f32.mrb[0].mxu0
        %v537 = vadd.f32 0.0, %v536
        %v538 = vpop.f32.mrb[0].mxu0
        %539 = vdwg.mxu0
        %v540 = vadd.f32 %v475, %v534
        %v541 = vadd.f32 %v476, %v537
        %s542 = scalar_lea.vmem %s1, 10
        %v543 = vld [vmem:[%s542] sm:$0x3]
        %v544 = vrot.slane %v427, 1
        %v545 = vrot.slane %v481, 1
        %v546 = vsel %vm361, %v544, %v545
        %v548 = vsel %vm264, %v546, 0
        %v551 = vsel %vm268, %v543, 0
        %553 = vmatprep.subr.bf16.mxu0 0
        %554 = vmatpush1.bf16.msra.mxu0 %v551
        %555 = vmatprep.subr.bf16.mxu0 0
        %556 = vmatpush1.bf16.msra.mxu0 0
        %557 = vmatprep.subr.bf16.mxu0 0
        %558 = vmatpush1.bf16.msra.mxu0 0
        %559 = vmatprep.subr.bf16.mxu0 0
        %560 = vmatpush1.bf16.msra.mxu0 0
        %561 = vmatprep.subr.bf16.mxu0 0
        %562 = vmatpush1.bf16.msra.mxu0 0
        %563 = vmatprep.subr.bf16.mxu0 0
        %564 = vmatpush1.bf16.msra.mxu0 0
        %565 = vmatprep.subr.bf16.mxu0 0
        %566 = vmatpush1.bf16.msra.mxu0 0
        %567 = vmatprep.subr.bf16.mxu0 0
        %568 = vmatpush1.bf16.msra.mxu0 0
        %569 = vmatprep.subr.bf16.mxu0 0
        %570 = vmatpush1.bf16.msra.mxu0 0
        %571 = vmatprep.subr.bf16.mxu0 0
        %572 = vmatpush1.bf16.msra.mxu0 0
        %573 = vmatprep.subr.bf16.mxu0 0
        %574 = vmatpush1.bf16.msra.mxu0 0
        %575 = vmatprep.subr.bf16.mxu0 0
        %576 = vmatpush1.bf16.msra.mxu0 0
        %577 = vmatprep.subr.bf16.mxu0 0
        %578 = vmatpush1.bf16.msra.mxu0 0
        %579 = vmatprep.subr.bf16.mxu0 0
        %580 = vmatpush1.bf16.msra.mxu0 0
        %581 = vmatprep.subr.bf16.mxu0 0
        %582 = vmatpush1.bf16.msra.mxu0 0
        %583 = vmatprep.subr.bf16.mxu0 0
        %584 = vmatpush1.bf16.msra.mxu0 0
        %585 = vmatprep.mubr.bf16.mxu0 0
        %586 = vmatmul.mubr.bf16.gmra.mrb[0].mxu0 %v548
        %v587 = vpop.f32.mrb[0].mxu0
        %v588 = vadd.f32 0.0, %v587
        %v589 = vpop.f32.mrb[0].mxu0
        %v590 = vpop.f32.mrb[0].mxu0
        %v591 = vadd.f32 0.0, %v590
        %v592 = vpop.f32.mrb[0].mxu0
        %593 = vdwg.mxu0
        %v594 = vadd.f32 %v540, %v588
        %v595 = vadd.f32 %v541, %v591
        %s596 = sadd.s32 %s233, 2
        %s597 = smul.u32 %s596, 3
        %s598 = smul.addr %s597, 4
        %s599 = scalar_lea.vmem %s211, %s598
        %v600 = vld [vmem:[%s599] sm:$0xf]
        %v601 = vld [vmem:[%s599 + $0x4] sm:$0xf]
        %v602 = vld [vmem:[%s599 + $0x8] sm:$0x1]
        %s603 = scalar_lea.vmem %s1, 12
        %v604 = vld [vmem:[%s603] sm:$0x3]
        %v607 = vunpack.c.l.b16 %v600
        %v608 = vunpack.c.l.b16 %v601
        %v609 = vpack.c.b16 %v608, %v607
        %v611 = vsel %vm264, %v609, 0
        %v614 = vsel %vm268, %v604, 0
        %616 = vmatprep.subr.bf16.mxu0 0
        %617 = vmatpush1.bf16.msra.mxu0 %v614
        %618 = vmatprep.subr.bf16.mxu0 0
        %619 = vmatpush1.bf16.msra.mxu0 0
        %620 = vmatprep.subr.bf16.mxu0 0
        %621 = vmatpush1.bf16.msra.mxu0 0
        %622 = vmatprep.subr.bf16.mxu0 0
        %623 = vmatpush1.bf16.msra.mxu0 0
        %624 = vmatprep.subr.bf16.mxu0 0
        %625 = vmatpush1.bf16.msra.mxu0 0
        %626 = vmatprep.subr.bf16.mxu0 0
        %627 = vmatpush1.bf16.msra.mxu0 0
        %628 = vmatprep.subr.bf16.mxu0 0
        %629 = vmatpush1.bf16.msra.mxu0 0
        %630 = vmatprep.subr.bf16.mxu0 0
        %631 = vmatpush1.bf16.msra.mxu0 0
        %632 = vmatprep.subr.bf16.mxu0 0
        %633 = vmatpush1.bf16.msra.mxu0 0
        %634 = vmatprep.subr.bf16.mxu0 0
        %635 = vmatpush1.bf16.msra.mxu0 0
        %636 = vmatprep.subr.bf16.mxu0 0
        %637 = vmatpush1.bf16.msra.mxu0 0
        %638 = vmatprep.subr.bf16.mxu0 0
        %639 = vmatpush1.bf16.msra.mxu0 0
        %640 = vmatprep.subr.bf16.mxu0 0
        %641 = vmatpush1.bf16.msra.mxu0 0
        %642 = vmatprep.subr.bf16.mxu0 0
        %643 = vmatpush1.bf16.msra.mxu0 0
        %644 = vmatprep.subr.bf16.mxu0 0
        %645 = vmatpush1.bf16.msra.mxu0 0
        %646 = vmatprep.subr.bf16.mxu0 0
        %647 = vmatpush1.bf16.msra.mxu0 0
        %648 = vmatprep.mubr.bf16.mxu0 0
        %649 = vmatmul.mubr.bf16.gmra.mrb[0].mxu0 %v611
        %v650 = vpop.f32.mrb[0].mxu0
        %v651 = vadd.f32 0.0, %v650
        %v652 = vpop.f32.mrb[0].mxu0
        %v653 = vpop.f32.mrb[0].mxu0
        %v654 = vadd.f32 0.0, %v653
        %v655 = vpop.f32.mrb[0].mxu0
        %656 = vdwg.mxu0
        %v657 = vadd.f32 %v594, %v651
        %v658 = vadd.f32 %v595, %v654
        %s659 = scalar_lea.vmem %s1, 14
        %v660 = vld [vmem:[%s659] sm:$0x3]
        %v662 = vunpack.c.l.b16 %v602
        %v663 = vpack.c.b16 %v662, %v662
        %v664 = vshrl.u32 %v609, 16
        %v666 = vshll.u32 %v609, 16
        %v668 = vrot.slane %v666, 1
        %v669 = vor.u32 %v664, %v668
        %v671 = vshll.u32 %v663, 16
        %v673 = vrot.slane %v671, 1
        %v674 = vsel %vm251, %v669, %v673
        %v676 = vsel %vm264, %v674, 0
        %v679 = vsel %vm268, %v660, 0
        %681 = vmatprep.subr.bf16.mxu0 0
        %682 = vmatpush1.bf16.msra.mxu0 %v679
        %683 = vmatprep.subr.bf16.mxu0 0
        %684 = vmatpush1.bf16.msra.mxu0 0
        %685 = vmatprep.subr.bf16.mxu0 0
        %686 = vmatpush1.bf16.msra.mxu0 0
        %687 = vmatprep.subr.bf16.mxu0 0
        %688 = vmatpush1.bf16.msra.mxu0 0
        %689 = vmatprep.subr.bf16.mxu0 0
        %690 = vmatpush1.bf16.msra.mxu0 0
        %691 = vmatprep.subr.bf16.mxu0 0
        %692 = vmatpush1.bf16.msra.mxu0 0
        %693 = vmatprep.subr.bf16.mxu0 0
        %694 = vmatpush1.bf16.msra.mxu0 0
        %695 = vmatprep.subr.bf16.mxu0 0
        %696 = vmatpush1.bf16.msra.mxu0 0
        %697 = vmatprep.subr.bf16.mxu0 0
        %698 = vmatpush1.bf16.msra.mxu0 0
        %699 = vmatprep.subr.bf16.mxu0 0
        %700 = vmatpush1.bf16.msra.mxu0 0
        %701 = vmatprep.subr.bf16.mxu0 0
        %702 = vmatpush1.bf16.msra.mxu0 0
        %703 = vmatprep.subr.bf16.mxu0 0
        %704 = vmatpush1.bf16.msra.mxu0 0
        %705 = vmatprep.subr.bf16.mxu0 0
        %706 = vmatpush1.bf16.msra.mxu0 0
        %707 = vmatprep.subr.bf16.mxu0 0
        %708 = vmatpush1.bf16.msra.mxu0 0
        %709 = vmatprep.subr.bf16.mxu0 0
        %710 = vmatpush1.bf16.msra.mxu0 0
        %711 = vmatprep.subr.bf16.mxu0 0
        %712 = vmatpush1.bf16.msra.mxu0 0
        %713 = vmatprep.mubr.bf16.mxu0 0
        %714 = vmatmul.mubr.bf16.gmra.mrb[0].mxu0 %v676
        %v715 = vpop.f32.mrb[0].mxu0
        %v716 = vadd.f32 0.0, %v715
        %v717 = vpop.f32.mrb[0].mxu0
        %v718 = vpop.f32.mrb[0].mxu0
        %v719 = vadd.f32 0.0, %v718
        %v720 = vpop.f32.mrb[0].mxu0
        %721 = vdwg.mxu0
        %v722 = vadd.f32 %v657, %v716
        %v723 = vadd.f32 %v658, %v719
        %s724 = scalar_lea.vmem %s1, 16
        %v725 = vld [vmem:[%s724] sm:$0x3]
        %v726 = vrot.slane %v609, 1
        %v727 = vrot.slane %v663, 1
        %v728 = vsel %vm361, %v726, %v727
        %v730 = vsel %vm264, %v728, 0
        %v733 = vsel %vm268, %v725, 0
        %735 = vmatprep.subr.bf16.mxu0 0
        %736 = vmatpush1.bf16.msra.mxu0 %v733
        %737 = vmatprep.subr.bf16.mxu0 0
        %738 = vmatpush1.bf16.msra.mxu0 0
        %739 = vmatprep.subr.bf16.mxu0 0
        %740 = vmatpush1.bf16.msra.mxu0 0
        %741 = vmatprep.subr.bf16.mxu0 0
        %742 = vmatpush1.bf16.msra.mxu0 0
        %743 = vmatprep.subr.bf16.mxu0 0
        %744 = vmatpush1.bf16.msra.mxu0 0
        %745 = vmatprep.subr.bf16.mxu0 0
        %746 = vmatpush1.bf16.msra.mxu0 0
        %747 = vmatprep.subr.bf16.mxu0 0
        %748 = vmatpush1.bf16.msra.mxu0 0
        %749 = vmatprep.subr.bf16.mxu0 0
        %750 = vmatpush1.bf16.msra.mxu0 0
        %751 = vmatprep.subr.bf16.mxu0 0
        %752 = vmatpush1.bf16.msra.mxu0 0
        %753 = vmatprep.subr.bf16.mxu0 0
        %754 = vmatpush1.bf16.msra.mxu0 0
        %755 = vmatprep.subr.bf16.mxu0 0
        %756 = vmatpush1.bf16.msra.mxu0 0
        %757 = vmatprep.subr.bf16.mxu0 0
        %758 = vmatpush1.bf16.msra.mxu0 0
        %759 = vmatprep.subr.bf16.mxu0 0
        %760 = vmatpush1.bf16.msra.mxu0 0
        %761 = vmatprep.subr.bf16.mxu0 0
        %762 = vmatpush1.bf16.msra.mxu0 0
        %763 = vmatprep.subr.bf16.mxu0 0
        %764 = vmatpush1.bf16.msra.mxu0 0
        %765 = vmatprep.subr.bf16.mxu0 0
        %766 = vmatpush1.bf16.msra.mxu0 0
        %767 = vmatprep.mubr.bf16.mxu0 0
        %768 = vmatmul.mubr.bf16.gmra.mrb[0].mxu0 %v730
        %v769 = vpop.f32.mrb[0].mxu0
        %v770 = vadd.f32 0.0, %v769
        %v771 = vpop.f32.mrb[0].mxu0
        %v772 = vpop.f32.mrb[0].mxu0
        %v773 = vadd.f32 0.0, %v772
        %v774 = vpop.f32.mrb[0].mxu0
        %775 = vdwg.mxu0
        %v776 = vadd.f32 %v722, %v770
        %v777 = vadd.f32 %v723, %v773
        %v779 = vlaneseq
        %v780 = vshrl.u32 %v779, 7
        %v781 = vsub.s32 0, %v780
        %v782 = vrot.slane %v225, %v781
        %v784 = vmul.f32 %v776, %v782
        %v785 = vmul.f32 %v777, %v782
        %v787 = vlaneseq
        %v788 = vshrl.u32 %v787, 7
        %v789 = vsub.s32 0, %v788
        %v790 = vrot.slane %v226, %v789
        %v792 = vadd.f32 %v784, %v790
        %v793 = vadd.f32 %v785, %v790
        %v794 = vmax.f32 %v792, 0.0
        %v795 = vmax.f32 %v793, 0.0
        %s796 = smul.u32 %s228, 16
        %s797 = scalar_lea.vmem %s221, %s796
        %798 = vst [vmem:[%s797] sm:$0xff] %v794
        %799 = vst [vmem:[%s797 + $0x8] sm:$0xff] %v795
      $region41: #{conv_bn_relu.3} parent=35 // loop_footer
        %s232 = sadd.s32 1, %s228
      $region42: #{conv_bn_relu.3} parent=35 // loop_footer_branch
        %227 = sbr.rel target = $region38
      $region43: #{conv_bn_relu.3} parent=35 // loop_exit
        _
      %s800 = smul.u32 16, %s20
      %p801 = scmp.lt.s32.totalorder %s19, 1
      %s802 = scalar_select %p801, %s19, 1
      %p803 = scmp.lt.s32.totalorder %s800, 15
      %s804 = scalar_select %p803, %s800, 15
      %s805 = smul.addr %s804, 2
      %s806 = smul.addr %s802, 32
      %s807 = sadd.s32 %s805, %s806
      %s808 = smul.addr %s807, 8
      %s809 = scalar_lea.vmem %s4, %s808
      // Predicated region
      $region44: #{conv_bn_relu.3} parent=35 // pred_check
        %p810 = pneg %p136
      $region45: #{conv_bn_relu.3} parent=35 // pred_check_branch
        %812 = sbr.rel (%p810) target = $region47
      $region46: #{conv_bn_relu.3} parent=35 // pred_region
        %s813 = smul.u32 16, %s20
      $region47: #{conv_bn_relu.3} parent=35 // pred_fallthru
        _
    $region36: #{conv_bn_relu.3} parent=5 // pred_fallthru
      _
    %p814 = scmp.le.s32.totalorder 2, %s10
    // Predicated region
    $region48: #{conv_bn_relu.3} parent=5 // pred_check
      %p815 = pneg %p814
    $region49: #{conv_bn_relu.3} parent=5 // pred_check_branch
      %817 = sbr.rel (%p815) target = $region51
    $region50: #{conv_bn_relu.3} parent=5 // pred_region
      %s818 = ssub.s32 %s10, 2
      // Predicated region
      $region52: #{conv_bn_relu.3} parent=50 // pred_check
        %p819 = pneg %p142
      $region53: #{conv_bn_relu.3} parent=50 // pred_check_branch
        %821 = sbr.rel (%p819) target = $region55
      $region54: #{conv_bn_relu.3} parent=50 // pred_region
        %s822 = smul.u32 16, %s22
        %p823 = scmp.lt.s32.totalorder %s21, 1
        %s824 = scalar_select %p823, %s21, 1
        %p825 = scmp.lt.s32.totalorder %s822, 15
        %s826 = scalar_select %p825, %s822, 15
        %s827 = smul.addr %s826, 2
        %s828 = smul.addr %s824, 32
        %s829 = sadd.s32 %s827, %s828
        %s830 = smul.addr %s829, 8
        %s831 = scalar_lea.vmem %s4, %s830
      $region55: #{conv_bn_relu.3} parent=50 // pred_fallthru
        _
    $region51: #{conv_bn_relu.3} parent=5 // pred_fallthru
      _
  $region6: #{conv_bn_relu.3} parent=0 // loop_footer
    %s14 = sadd.s32 1, %s10
  $region7: #{conv_bn_relu.3} parent=0 // loop_footer_branch
    %9 = sbr.rel target = $region3
  $region8: #{conv_bn_relu.3} parent=0 // loop_exit
    _

// kernel: conv_bn_relu.2
$region0: #{conv_bn_relu.2}
  #allocation0 [shape = 'u32[]', space=smem, size = 0x4, offset = 0x4, fixed_abs, tag = 'smem constant byte address 0x4 - core index']
  #allocation1 [shape = 'u32[144,128]{1,0:T(1,128)}', space=vmem, size = 0x12000, scoped, tag = 'internal scratch']
  %s0 = inlined_call_operand.vmem [shape: bf16[2,18,18,4], index: 0, kind: input, shape index: {}]
  %s1 = inlined_call_operand.vmem [shape: bf16[9,4,128], index: 1, kind: input, shape index: {}]
  %s2 = inlined_call_operand.vmem [shape: f32[2,1,128], index: 2, kind: output, shape index: {0}]
  %s3 = inlined_call_operand.vmem [shape: f32[2,1,128], index: 3, kind: output, shape index: {1}]
  %4 = xla_tuple %s2, %s3
  %s5 = sld [smem:[#allocation0]]
  $region56: #{conv_bn_relu.2} parent=0
    _
  %s7 = ssub.s32 1, %s5
  %s8 = scalar_select 0, %s7, %s5
  loop: start=0, step=1, limit=4
  $region2: #{conv_bn_relu.2} parent=0 // loop_pre_header
    _
  $region3: #{conv_bn_relu.2} parent=0 // loop_header
    %s10 = sphi 0, %s14
    %p11 = scmp.ge.s32.totalorder %s10, 4
    %s17 = sphi 0, %s29
    %s18 = sphi 0, %s25
    %s19 = sphi 0, %s17
    %s20 = sphi 0, %s18
    %s21 = sphi 0, %s19
    %s22 = sphi 0, %s20
    %s32 = sphi 0, %s34
    %s35 = sphi 0, %s32
    %s36 = sphi 0, %s35
    %s52 = sphi 0, %s36
    %s56 = sphi 0, %s56
    %s58 = sphi 0, %s56
    %s59 = sphi 0, %s58
    %s73 = sphi 0, %s59
    %s81 = sphi 0, %s83
    %s84 = sphi 0, %s81
    %s85 = sphi 0, %s84
    %s101 = sphi 0, %s85
    %s109 = sphi 0, %s111
    %s112 = sphi 0, %s109
    %s113 = sphi 0, %s112
    %s129 = sphi 0, %s113
  $region4: #{conv_bn_relu.2} parent=0 // loop_header_branch
    %13 = sbr.rel (%p11) target = $region8
  $region5: #{conv_bn_relu.2} parent=0 // loop_body
    %s15 = ssub.s32 %s10, 1
    %s16 = ssub.s32 %s10, 2
    %s23 = sadd.s32 1, %s18
    %p24 = scmp.ge.s32.totalorder %s23, 1
    %s25 = scalar_select %p24, 0, %s23
    %s26 = sadd.s32 1, %s17
    %s27 = scalar_select %p24, %s26, %s17
    %p28 = scmp.ge.s32.totalorder %s27, 2
    %s29 = scalar_select %p28, 0, %s27
    %s30 = ssub.s32 %s17, %s29
    %p31 = scmp.eq.s32.totalorder %s30, 0
    %s33 = sadd.s32 %s32, 1
    %s34 = scalar_select %p31, %s32, %s33
    %p37 = pneg %p31
    %p38 = scmp.eq.s32.totalorder %s10, 1
    %p39 = por %p37, %p38
    %p40 = scmp.ne.s32.totalorder %s32, %s35
    %p41 = scmp.eq.s32.totalorder %s10, 0
    %p42 = por %p40, %p41
    %p43 = scmp.ne.s32.totalorder %s32, %s35
    %p44 = scmp.eq.s32.totalorder %s15, 1
    %p45 = por %p43, %p44
    %p46 = scmp.ne.s32.totalorder %s35, %s36
    %p47 = scmp.eq.s32.totalorder %s15, 0
    %p48 = por %p46, %p47
    %p49 = scmp.ne.s32.totalorder %s35, %s36
    %p50 = scmp.eq.s32.totalorder %s16, 1
    %p51 = por %p49, %p50
    %p53 = scmp.ne.s32.totalorder %s36, %s52
    %p54 = scmp.eq.s32.totalorder %s16, 0
    %p55 = por %p53, %p54
    %s57 = sadd.s32 %s56, 1
    %p60 = scmp.eq.s32.totalorder %s10, 1
    %p61 = scmp.ne.s32.totalorder %s56, %s58
    %p62 = scmp.eq.s32.totalorder %s10, 0
    %p63 = por %p61, %p62
    %p64 = scmp.ne.s32.totalorder %s56, %s58
    %p65 = scmp.eq.s32.totalorder %s15, 1
    %p66 = por %p64, %p65
    %p67 = scmp.ne.s32.totalorder %s58, %s59
    %p68 = scmp.eq.s32.totalorder %s15, 0
    %p69 = por %p67, %p68
    %p70 = scmp.ne.s32.totalorder %s58, %s59
    %p71 = scmp.eq.s32.totalorder %s16, 1
    %p72 = por %p70, %p71
    %p74 = scmp.ne.s32.totalorder %s59, %s73
    %p75 = scmp.eq.s32.totalorder %s16, 0
    %p76 = por %p74, %p75
    %s77 = sadd.s32 %s17, %s18
    %s78 = sadd.s32 %s29, %s25
    %s79 = ssub.s32 %s77, %s78
    %p80 = scmp.eq.s32.totalorder %s79, 0
    %s82 = sadd.s32 %s81, 1
    %s83 = scalar_select %p80, %s81, %s82
    %p86 = pneg %p80
    %p87 = scmp.eq.s32.totalorder %s10, 1
    %p88 = por %p86, %p87
    %p89 = scmp.ne.s32.totalorder %s81, %s84
    %p90 = scmp.eq.s32.totalorder %s10, 0
    %p91 = por %p89, %p90
    %p92 = scmp.ne.s32.totalorder %s81, %s84
    %p93 = scmp.eq.s32.totalorder %s15, 1
    %p94 = por %p92, %p93
    %p95 = scmp.ne.s32.totalorder %s84, %s85
    %p96 = scmp.eq.s32.totalorder %s15, 0
    %p97 = por %p95, %p96
    %p98 = scmp.ne.s32.totalorder %s84, %s85
    %p99 = scmp.eq.s32.totalorder %s16, 1
    %p100 = por %p98, %p99
    %p102 = scmp.ne.s32.totalorder %s85, %s101
    %p103 = scmp.eq.s32.totalorder %s16, 0
    %p104 = por %p102, %p103
    %s105 = sadd.s32 %s17, %s18
    %s106 = sadd.s32 %s29, %s25
    %s107 = ssub.s32 %s105, %s106
    %p108 = scmp.eq.s32.totalorder %s107, 0
    %s110 = sadd.s32 %s109, 1
    %s111 = scalar_select %p108, %s109, %s110
    %p114 = pneg %p108
    %p115 = scmp.eq.s32.totalorder %s10, 1
    %p116 = por %p114, %p115
    %p117 = scmp.ne.s32.totalorder %s109, %s112
    %p118 = scmp.eq.s32.totalorder %s10, 0
    %p119 = por %p117, %p118
    %p120 = scmp.ne.s32.totalorder %s109, %s112
    %p121 = scmp.eq.s32.totalorder %s15, 1
    %p122 = por %p120, %p121
    %p123 = scmp.ne.s32.totalorder %s112, %s113
    %p124 = scmp.eq.s32.totalorder %s15, 0
    %p125 = por %p123, %p124
    %p126 = scmp.ne.s32.totalorder %s112, %s113
    %p127 = scmp.eq.s32.totalorder %s16, 1
    %p128 = por %p126, %p127
    %p130 = scmp.ne.s32.totalorder %s113, %s129
    %p131 = scmp.eq.s32.totalorder %s16, 0
    %p132 = por %p130, %p131
    %p133 = scmp.le.s32.totalorder 1, %s10
    %p134 = scmp.lt.s32.totalorder %s10, 3
    %p135 = pnand %p133, %p134
    %p136 = pneg %p135
    // Predicated region
    $region9: #{conv_bn_relu.2} parent=5 // pred_check
      _
    $region10: #{conv_bn_relu.2} parent=5 // pred_check_branch
      %138 = sbr.rel (%p135) target = $region12
    $region11: #{conv_bn_relu.2} parent=5 // pred_region
      %s139 = ssub.s32 %s10, 1
      // Predicated region
      $region13: #{conv_bn_relu.2} parent=11 // pred_check
        %p140 = pneg %p69
      $region14: #{conv_bn_relu.2} parent=11 // pred_check_branch
        %142 = sbr.rel (%p140) target = $region16
      $region15: #{conv_bn_relu.2} parent=11 // pred_region
        _
      $region16: #{conv_bn_relu.2} parent=11 // pred_fallthru
        _
    $region12: #{conv_bn_relu.2} parent=5 // pred_fallthru
      _
    %p143 = scmp.lt.s32.totalorder %s10, 2
    // Predicated region
    $region17: #{conv_bn_relu.2} parent=5 // pred_check
      %p144 = pneg %p143
    $region18: #{conv_bn_relu.2} parent=5 // pred_check_branch
      %146 = sbr.rel (%p144) target = $region20
    $region19: #{conv_bn_relu.2} parent=5 // pred_region
      // Predicated region
      $region21: #{conv_bn_relu.2} parent=19 // pred_check
        %p147 = pneg %p42
      $region22: #{conv_bn_relu.2} parent=19 // pred_check_branch
        %149 = sbr.rel (%p147) target = $region24
      $region23: #{conv_bn_relu.2} parent=19 // pred_region
        %p150 = scmp.lt.s32.totalorder %s17, 1
        %s151 = scalar_select %p150, %s17, 1
        %s152 = smul.addr %s151, 54
        %s153 = smul.addr %s152, 4
        %s154 = scalar_lea.vmem %s0, %s153
      $region24: #{conv_bn_relu.2} parent=19 // pred_fallthru
        _
    $region20: #{conv_bn_relu.2} parent=5 // pred_fallthru
      _
    %p155 = scmp.le.s32.totalorder 1, %s10
    %p156 = scmp.lt.s32.totalorder %s10, 3
    %p157 = pnand %p155, %p156
    %p158 = pneg %p157
    // Predicated region
    $region25: #{conv_bn_relu.2} parent=5 // pred_check
      _
    $region26: #{conv_bn_relu.2} parent=5 // pred_check_branch
      %160 = sbr.rel (%p157) target = $region28
    $region27: #{conv_bn_relu.2} parent=5 // pred_region
      %s161 = ssub.s32 %s10, 1
      %p162 = scmp.lt.s32.totalorder %s19, 1
      %s163 = scalar_select %p162, %s19, 1
      %s164 = smul.addr %s163, 54
      %s165 = smul.addr %s164, 4
      %s166 = scalar_lea.vmem %s0, %s165
      %p167 = pneg %p48
      %p168 = pneg %p45
      %p169 = pneg %p69
      %p170 = pneg %p66
      %p171 = pneg %p97
      %p172 = pneg %p94
      %s173 = sadd.s32 %s19, %s20
      %p174 = scmp.lt.s32.totalorder %s173, 1
      %s175 = scalar_select %p174, %s173, 1
      %s176 = scalar_lea.vmem %s2, %s175
      %p177 = pneg %p125
      %p178 = pneg %p122
      %s179 = sadd.s32 %s19, %s20
      %p180 = scmp.lt.s32.totalorder %s179, 1
      %s181 = scalar_select %p180, %s179, 1
      %s182 = scalar_lea.vmem %s3, %s181
      %p183 = scmp.lt.s32.totalorder %s19, 1
      %s184 = scalar_select %p183, %s19, 1
      %s185 = smul.addr %s184, 54
      %s186 = smul.addr %s185, 4
      %s187 = scalar_lea.vmem %s0, %s186
      %s188 = sadd.s32 %s19, %s20
      %p189 = scmp.lt.s32.totalorder %s188, 1
      %s190 = scalar_select %p189, %s188, 1
      %s191 = scalar_lea.vmem %s2, %s190
      %s192 = sadd.s32 %s19, %s20
      %s193 = sadd.s32 %s19, %s20
      %p194 = scmp.lt.s32.totalorder %s193, 1
      %s195 = scalar_select %p194, %s193, 1
      %s196 = scalar_lea.vmem %s3, %s195
      %s197 = sadd.s32 %s19, %s20
      %s199 = smul.u32 %s20, 16
      loop: start=0, step=1, limit=16
      $region29: #{conv_bn_relu.2} parent=27 // loop_pre_header
        _
      $region30: #{conv_bn_relu.2} parent=27 // loop_header
        %s201 = sphi 0, %s205
        %p202 = scmp.ge.s32.totalorder %s201, 16
        %v206 = vphi 0.0, %v760
        %v207 = vphi 0.0, %v770
      $region31: #{conv_bn_relu.2} parent=27 // loop_header_branch
        %204 = sbr.rel (%p202) target = $region35
      $region32: #{conv_bn_relu.2} parent=27 // loop_body
        %s208 = sadd.s32 %s199, %s201
        %s209 = smul.u32 %s208, 3
        %s210 = smul.addr %s209, 4
        %s211 = scalar_lea.vmem %s187, %s210
        %v212 = vld [vmem:[%s211] sm:$0xf]
        %v213 = vld [vmem:[%s211 + $0x4] sm:$0xf]
        %v214 = vld [vmem:[%s211 + $0x8] sm:$0x1]
        %v215 = vld [vmem:[%s1] sm:$0x3]
        %s216 = scalar_lea.vmem %s1, 2
        %v217 = vld [vmem:[%s216] sm:$0x3]
        %v221 = vunpack.c.l.b16 %v212
        %v222 = vunpack.c.l.b16 %v213
        %v223 = vunpack.c.l.b16 %v214
        %v224 = vpack.c.b16 %v222, %v221
        %v225 = vpack.c.b16 %v223, %v223
        %vm226 = vsmask.f32 7424
        %v228 = vshrl.u32 %v224, 16
        %v230 = vshll.u32 %v224, 16
        %v232 = vrot.slane %v230, 1
        %v233 = vor.u32 %v228, %v232
        %v235 = vshll.u32 %v225, 16
        %v237 = vrot.slane %v235, 1
        %v238 = vsel %vm226, %v233, %v237
        %vm239 = vcmask 31744
        %v241 = vsel %vm239, %v238, 0
        %vm243 = vcmask 1041408
        %v245 = vsel %vm243, %v217, 0
        %247 = vmatprep.subr.bf16.mxu0 0
        %248 = vmatpush1.bf16.msra.mxu0 %v245
        %249 = vmatprep.subr.bf16.mxu0 0
        %250 = vmatpush1.bf16.msra.mxu0 0
        %251 = vmatprep.subr.bf16.mxu0 0
        %252 = vmatpush1.bf16.msra.mxu0 0
        %253 = vmatprep.subr.bf16.mxu0 0
        %254 = vmatpush1.bf16.msra.mxu0 0
        %255 = vmatprep.subr.bf16.mxu0 0
        %256 = vmatpush1.bf16.msra.mxu0 0
        %257 = vmatprep.subr.bf16.mxu0 0
        %258 = vmatpush1.bf16.msra.mxu0 0
        %259 = vmatprep.subr.bf16.mxu0 0
        %260 = vmatpush1.bf16.msra.mxu0 0
        %261 = vmatprep.subr.bf16.mxu0 0
        %262 = vmatpush1.bf16.msra.mxu0 0
        %263 = vmatprep.subr.bf16.mxu0 0
        %264 = vmatpush1.bf16.msra.mxu0 0
        %265 = vmatprep.subr.bf16.mxu0 0
        %266 = vmatpush1.bf16.msra.mxu0 0
        %267 = vmatprep.subr.bf16.mxu0 0
        %268 = vmatpush1.bf16.msra.mxu0 0
        %269 = vmatprep.subr.bf16.mxu0 0
        %270 = vmatpush1.bf16.msra.mxu0 0
        %271 = vmatprep.subr.bf16.mxu0 0
        %272 = vmatpush1.bf16.msra.mxu0 0
        %273 = vmatprep.subr.bf16.mxu0 0
        %274 = vmatpush1.bf16.msra.mxu0 0
        %275 = vmatprep.subr.bf16.mxu0 0
        %276 = vmatpush1.bf16.msra.mxu0 0
        %277 = vmatprep.subr.bf16.mxu0 0
        %278 = vmatpush1.bf16.msra.mxu0 0
        %279 = vmatprep.mubr.bf16.mxu0 0
        %280 = vmatmul.mubr.bf16.gmra.mrb[0].mxu0 %v241
        %v281 = vpop.f32.mrb[0].mxu0
        %v282 = vadd.f32 0.0, %v281
        %v283 = vpop.f32.mrb[0].mxu0
        %v284 = vpop.f32.mrb[0].mxu0
        %v285 = vadd.f32 0.0, %v284
        %v286 = vpop.f32.mrb[0].mxu0
        %287 = vdwg.mxu0
        %v288 = vsel %vm239, %v224, 0
        %v291 = vsel %vm243, %v215, 0
        %293 = vmatprep.subr.bf16.mxu0 0
        %294 = vmatpush1.bf16.msra.mxu0 %v291
        %295 = vmatprep.subr.bf16.mxu0 0
        %296 = vmatpush1.bf16.msra.mxu0 0
        %297 = vmatprep.subr.bf16.mxu0 0
        %298 = vmatpush1.bf16.msra.mxu0 0
        %299 = vmatprep.subr.bf16.mxu0 0
        %300 = vmatpush1.bf16.msra.mxu0 0
        %301 = vmatprep.subr.bf16.mxu0 0
        %302 = vmatpush1.bf16.msra.mxu0 0
        %303 = vmatprep.subr.bf16.mxu0 0
        %304 = vmatpush1.bf16.msra.mxu0 0
        %305 = vmatprep.subr.bf16.mxu0 0
        %306 = vmatpush1.bf16.msra.mxu0 0
        %307 = vmatprep.subr.bf16.mxu0 0
        %308 = vmatpush1.bf16.msra.mxu0 0
        %309 = vmatprep.subr.bf16.mxu0 0
        %310 = vmatpush1.bf16.msra.mxu0 0
        %311 = vmatprep.subr.bf16.mxu0 0
        %312 = vmatpush1.bf16.msra.mxu0 0
        %313 = vmatprep.subr.bf16.mxu0 0
        %314 = vmatpush1.bf16.msra.mxu0 0
        %315 = vmatprep.subr.bf16.mxu0 0
        %316 = vmatpush1.bf16.msra.mxu0 0
        %317 = vmatprep.subr.bf16.mxu0 0
        %318 = vmatpush1.bf16.msra.mxu0 0
        %319 = vmatprep.subr.bf16.mxu0 0
        %320 = vmatpush1.bf16.msra.mxu0 0
        %321 = vmatprep.subr.bf16.mxu0 0
        %322 = vmatpush1.bf16.msra.mxu0 0
        %323 = vmatprep.subr.bf16.mxu0 0
        %324 = vmatpush1.bf16.msra.mxu0 0
        %325 = vmatprep.mubr.bf16.mxu0 0
        %326 = vmatmul.mubr.bf16.gmra.mrb[0].mxu0 %v288
        %v327 = vpop.f32.mrb[0].mxu0
        %v328 = vadd.f32 %v282, %v327
        %v329 = vpop.f32.mrb[0].mxu0
        %v330 = vpop.f32.mrb[0].mxu0
        %v331 = vadd.f32 %v285, %v330
        %v332 = vpop.f32.mrb[0].mxu0
        %333 = vdwg.mxu0
        %s334 = scalar_lea.vmem %s1, 4
        %v335 = vld [vmem:[%s334] sm:$0x3]
        %vm336 = vcmask 1046528
        %v337 = vrot.slane %v224, 1
        %v338 = vrot.slane %v225, 1
        %v339 = vsel %vm336, %v337, %v338
        %v341 = vsel %vm239, %v339, 0
        %v344 = vsel %vm243, %v335, 0
        %346 = vmatprep.subr.bf16.mxu0 0
        %347 = vmatpush1.bf16.msra.mxu0 %v344
        %348 = vmatprep.subr.bf16.mxu0 0
        %349 = vmatpush1.bf16.msra.mxu0 0
        %350 = vmatprep.subr.bf16.mxu0 0
        %351 = vmatpush1.bf16.msra.mxu0 0
        %352 = vmatprep.subr.bf16.mxu0 0
        %353 = vmatpush1.bf16.msra.mxu0 0
        %354 = vmatprep.subr.bf16.mxu0 0
        %355 = vmatpush1.bf16.msra.mxu0 0
        %356 = vmatprep.subr.bf16.mxu0 0
        %357 = vmatpush1.bf16.msra.mxu0 0
        %358 = vmatprep.subr.bf16.mxu0 0
        %359 = vmatpush1.bf16.msra.mxu0 0
        %360 = vmatprep.subr.bf16.mxu0 0
        %361 = vmatpush1.bf16.msra.mxu0 0
        %362 = vmatprep.subr.bf16.mxu0 0
        %363 = vmatpush1.bf16.msra.mxu0 0
        %364 = vmatprep.subr.bf16.mxu0 0
        %365 = vmatpush1.bf16.msra.mxu0 0
        %366 = vmatprep.subr.bf16.mxu0 0
        %367 = vmatpush1.bf16.msra.mxu0 0
        %368 = vmatprep.subr.bf16.mxu0 0
        %369 = vmatpush1.bf16.msra.mxu0 0
        %370 = vmatprep.subr.bf16.mxu0 0
        %371 = vmatpush1.bf16.msra.mxu0 0
        %372 = vmatprep.subr.bf16.mxu0 0
        %373 = vmatpush1.bf16.msra.mxu0 0
        %374 = vmatprep.subr.bf16.mxu0 0
        %375 = vmatpush1.bf16.msra.mxu0 0
        %376 = vmatprep.subr.bf16.mxu0 0
        %377 = vmatpush1.bf16.msra.mxu0 0
        %378 = vmatprep.mubr.bf16.mxu0 0
        %379 = vmatmul.mubr.bf16.gmra.mrb[0].mxu0 %v341
        %v380 = vpop.f32.mrb[0].mxu0
        %v381 = vadd.f32 0.0, %v380
        %v382 = vpop.f32.mrb[0].mxu0
        %v383 = vpop.f32.mrb[0].mxu0
        %v384 = vadd.f32 0.0, %v383
        %v385 = vpop.f32.mrb[0].mxu0
        %386 = vdwg.mxu0
        %v387 = vadd.f32 %v328, %v381
        %v388 = vadd.f32 %v331, %v384
        %s389 = sadd.s32 %s208, 1
        %s390 = smul.u32 %s389, 3
        %s391 = smul.addr %s390, 4
        %s392 = scalar_lea.vmem %s187, %s391
        %v393 = vld [vmem:[%s392] sm:$0xf]
        %v394 = vld [vmem:[%s392 + $0x4] sm:$0xf]
        %v395 = vld [vmem:[%s392 + $0x8] sm:$0x1]
        %s396 = scalar_lea.vmem %s1, 6
        %v397 = vld [vmem:[%s396] sm:$0x3]
        %v400 = vunpack.c.l.b16 %v393
        %v401 = vunpack.c.l.b16 %v394
        %v402 = vpack.c.b16 %v401, %v400
        %v404 = vsel %vm239, %v402, 0
        %v407 = vsel %vm243, %v397, 0
        %409 = vmatprep.subr.bf16.mxu0 0
        %410 = vmatpush1.bf16.msra.mxu0 %v407
        %411 = vmatprep.subr.bf16.mxu0 0
        %412 = vmatpush1.bf16.msra.mxu0 0
        %413 = vmatprep.subr.bf16.mxu0 0
        %414 = vmatpush1.bf16.msra.mxu0 0
        %415 = vmatprep.subr.bf16.mxu0 0
        %416 = vmatpush1.bf16.msra.mxu0 0
        %417 = vmatprep.subr.bf16.mxu0 0
        %418 = vmatpush1.bf16.msra.mxu0 0
        %419 = vmatprep.subr.bf16.mxu0 0
        %420 = vmatpush1.bf16.msra.mxu0 0
        %421 = vmatprep.subr.bf16.mxu0 0
        %422 = vmatpush1.bf16.msra.mxu0 0
        %423 = vmatprep.subr.bf16.mxu0 0
        %424 = vmatpush1.bf16.msra.mxu0 0
        %425 = vmatprep.subr.bf16.mxu0 0
        %426 = vmatpush1.bf16.msra.mxu0 0
        %427 = vmatprep.subr.bf16.mxu0 0
        %428 = vmatpush1.bf16.msra.mxu0 0
        %429 = vmatprep.subr.bf16.mxu0 0
        %430 = vmatpush1.bf16.msra.mxu0 0
        %431 = vmatprep.subr.bf16.mxu0 0
        %432 = vmatpush1.bf16.msra.mxu0 0
        %433 = vmatprep.subr.bf16.mxu0 0
        %434 = vmatpush1.bf16.msra.mxu0 0
        %435 = vmatprep.subr.bf16.mxu0 0
        %436 = vmatpush1.bf16.msra.mxu0 0
        %437 = vmatprep.subr.bf16.mxu0 0
        %438 = vmatpush1.bf16.msra.mxu0 0
        %439 = vmatprep.subr.bf16.mxu0 0
        %440 = vmatpush1.bf16.msra.mxu0 0
        %441 = vmatprep.mubr.bf16.mxu0 0
        %442 = vmatmul.mubr.bf16.gmra.mrb[0].mxu0 %v404
        %v443 = vpop.f32.mrb[0].mxu0
        %v444 = vadd.f32 0.0, %v443
        %v445 = vpop.f32.mrb[0].mxu0
        %v446 = vpop.f32.mrb[0].mxu0
        %v447 = vadd.f32 0.0, %v446
        %v448 = vpop.f32.mrb[0].mxu0
        %449 = vdwg.mxu0
        %v450 = vadd.f32 %v387, %v444
        %v451 = vadd.f32 %v388, %v447
        %s452 = scalar_lea.vmem %s1, 8
        %v453 = vld [vmem:[%s452] sm:$0x3]
        %v455 = vunpack.c.l.b16 %v395
        %v456 = vpack.c.b16 %v455, %v455
        %v457 = vshrl.u32 %v402, 16
        %v459 = vshll.u32 %v402, 16
        %v461 = vrot.slane %v459, 1
        %v462 = vor.u32 %v457, %v461
        %v464 = vshll.u32 %v456, 16
        %v466 = vrot.slane %v464, 1
        %v467 = vsel %vm226, %v462, %v466
        %v469 = vsel %vm239, %v467, 0
        %v472 = vsel %vm243, %v453, 0
        %474 = vmatprep.subr.bf16.mxu0 0
        %475 = vmatpush1.bf16.msra.mxu0 %v472
        %476 = vmatprep.subr.bf16.mxu0 0
        %477 = vmatpush1.bf16.msra.mxu0 0
        %478 = vmatprep.subr.bf16.mxu0 0
        %479 = vmatpush1.bf16.msra.mxu0 0
        %480 = vmatprep.subr.bf16.mxu0 0
        %481 = vmatpush1.bf16.msra.mxu0 0
        %482 = vmatprep.subr.bf16.mxu0 0
        %483 = vmatpush1.bf16.msra.mxu0 0
        %484 = vmatprep.subr.bf16.mxu0 0
        %485 = vmatpush1.bf16.msra.mxu0 0
        %486 = vmatprep.subr.bf16.mxu0 0
        %487 = vmatpush1.bf16.msra.mxu0 0
        %488 = vmatprep.subr.bf16.mxu0 0
        %489 = vmatpush1.bf16.msra.mxu0 0
        %490 = vmatprep.subr.bf16.mxu0 0
        %491 = vmatpush1.bf16.msra.mxu0 0
        %492 = vmatprep.subr.bf16.mxu0 0
        %493 = vmatpush1.bf16.msra.mxu0 0
        %494 = vmatprep.subr.bf16.mxu0 0
        %495 = vmatpush1.bf16.msra.mxu0 0
        %496 = vmatprep.subr.bf16.mxu0 0
        %497 = vmatpush1.bf16.msra.mxu0 0
        %498 = vmatprep.subr.bf16.mxu0 0
        %499 = vmatpush1.bf16.msra.mxu0 0
        %500 = vmatprep.subr.bf16.mxu0 0
        %501 = vmatpush1.bf16.msra.mxu0 0
        %502 = vmatprep.subr.bf16.mxu0 0
        %503 = vmatpush1.bf16.msra.mxu0 0
        %504 = vmatprep.subr.bf16.mxu0 0
        %505 = vmatpush1.bf16.msra.mxu0 0
        %506 = vmatprep.mubr.bf16.mxu0 0
        %507 = vmatmul.mubr.bf16.gmra.mrb[0].mxu0 %v469
        %v508 = vpop.f32.mrb[0].mxu0
        %v509 = vadd.f32 0.0, %v508
        %v510 = vpop.f32.mrb[0].mxu0
        %v511 = vpop.f32.mrb[0].mxu0
        %v512 = vadd.f32 0.0, %v511
        %v513 = vpop.f32.mrb[0].mxu0
        %514 = vdwg.mxu0
        %v515 = vadd.f32 %v450, %v509
        %v516 = vadd.f32 %v451, %v512
        %s517 = scalar_lea.vmem %s1, 10
        %v518 = vld [vmem:[%s517] sm:$0x3]
        %v519 = vrot.slane %v402, 1
        %v520 = vrot.slane %v456, 1
        %v521 = vsel %vm336, %v519, %v520
        %v523 = vsel %vm239, %v521, 0
        %v526 = vsel %vm243, %v518, 0
        %528 = vmatprep.subr.bf16.mxu0 0
        %529 = vmatpush1.bf16.msra.mxu0 %v526
        %530 = vmatprep.subr.bf16.mxu0 0
        %531 = vmatpush1.bf16.msra.mxu0 0
        %532 = vmatprep.subr.bf16.mxu0 0
        %533 = vmatpush1.bf16.msra.mxu0 0
        %534 = vmatprep.subr.bf16.mxu0 0
        %535 = vmatpush1.bf16.msra.mxu0 0
        %536 = vmatprep.subr.bf16.mxu0 0
        %537 = vmatpush1.bf16.msra.mxu0 0
        %538 = vmatprep.subr.bf16.mxu0 0
        %539 = vmatpush1.bf16.msra.mxu0 0
        %540 = vmatprep.subr.bf16.mxu0 0
        %541 = vmatpush1.bf16.msra.mxu0 0
        %542 = vmatprep.subr.bf16.mxu0 0
        %543 = vmatpush1.bf16.msra.mxu0 0
        %544 = vmatprep.subr.bf16.mxu0 0
        %545 = vmatpush1.bf16.msra.mxu0 0
        %546 = vmatprep.subr.bf16.mxu0 0
        %547 = vmatpush1.bf16.msra.mxu0 0
        %548 = vmatprep.subr.bf16.mxu0 0
        %549 = vmatpush1.bf16.msra.mxu0 0
        %550 = vmatprep.subr.bf16.mxu0 0
        %551 = vmatpush1.bf16.msra.mxu0 0
        %552 = vmatprep.subr.bf16.mxu0 0
        %553 = vmatpush1.bf16.msra.mxu0 0
        %554 = vmatprep.subr.bf16.mxu0 0
        %555 = vmatpush1.bf16.msra.mxu0 0
        %556 = vmatprep.subr.bf16.mxu0 0
        %557 = vmatpush1.bf16.msra.mxu0 0
        %558 = vmatprep.subr.bf16.mxu0 0
        %559 = vmatpush1.bf16.msra.mxu0 0
        %560 = vmatprep.mubr.bf16.mxu0 0
        %561 = vmatmul.mubr.bf16.gmra.mrb[0].mxu0 %v523
        %v562 = vpop.f32.mrb[0].mxu0
        %v563 = vadd.f32 0.0, %v562
        %v564 = vpop.f32.mrb[0].mxu0
        %v565 = vpop.f32.mrb[0].mxu0
        %v566 = vadd.f32 0.0, %v565
        %v567 = vpop.f32.mrb[0].mxu0
        %568 = vdwg.mxu0
        %v569 = vadd.f32 %v515, %v563
        %v570 = vadd.f32 %v516, %v566
        %s571 = sadd.s32 %s208, 2
        %s572 = smul.u32 %s571, 3
        %s573 = smul.addr %s572, 4
        %s574 = scalar_lea.vmem %s187, %s573
        %v575 = vld [vmem:[%s574] sm:$0xf]
        %v576 = vld [vmem:[%s574 + $0x4] sm:$0xf]
        %v577 = vld [vmem:[%s574 + $0x8] sm:$0x1]
        %s578 = scalar_lea.vmem %s1, 12
        %v579 = vld [vmem:[%s578] sm:$0x3]
        %v582 = vunpack.c.l.b16 %v575
        %v583 = vunpack.c.l.b16 %v576
        %v584 = vpack.c.b16 %v583, %v582
        %v586 = vsel %vm239, %v584, 0
        %v589 = vsel %vm243, %v579, 0
        %591 = vmatprep.subr.bf16.mxu0 0
        %592 = vmatpush1.bf16.msra.mxu0 %v589
        %593 = vmatprep.subr.bf16.mxu0 0
        %594 = vmatpush1.bf16.msra.mxu0 0
        %595 = vmatprep.subr.bf16.mxu0 0
        %596 = vmatpush1.bf16.msra.mxu0 0
        %597 = vmatprep.subr.bf16.mxu0 0
        %598 = vmatpush1.bf16.msra.mxu0 0
        %599 = vmatprep.subr.bf16.mxu0 0
        %600 = vmatpush1.bf16.msra.mxu0 0
        %601 = vmatprep.subr.bf16.mxu0 0
        %602 = vmatpush1.bf16.msra.mxu0 0
        %603 = vmatprep.subr.bf16.mxu0 0
        %604 = vmatpush1.bf16.msra.mxu0 0
        %605 = vmatprep.subr.bf16.mxu0 0
        %606 = vmatpush1.bf16.msra.mxu0 0
        %607 = vmatprep.subr.bf16.mxu0 0
        %608 = vmatpush1.bf16.msra.mxu0 0
        %609 = vmatprep.subr.bf16.mxu0 0
        %610 = vmatpush1.bf16.msra.mxu0 0
        %611 = vmatprep.subr.bf16.mxu0 0
        %612 = vmatpush1.bf16.msra.mxu0 0
        %613 = vmatprep.subr.bf16.mxu0 0
        %614 = vmatpush1.bf16.msra.mxu0 0
        %615 = vmatprep.subr.bf16.mxu0 0
        %616 = vmatpush1.bf16.msra.mxu0 0
        %617 = vmatprep.subr.bf16.mxu0 0
        %618 = vmatpush1.bf16.msra.mxu0 0
        %619 = vmatprep.subr.bf16.mxu0 0
        %620 = vmatpush1.bf16.msra.mxu0 0
        %621 = vmatprep.subr.bf16.mxu0 0
        %622 = vmatpush1.bf16.msra.mxu0 0
        %623 = vmatprep.mubr.bf16.mxu0 0
        %624 = vmatmul.mubr.bf16.gmra.mrb[0].mxu0 %v586
        %v625 = vpop.f32.mrb[0].mxu0
        %v626 = vadd.f32 0.0, %v625
        %v627 = vpop.f32.mrb[0].mxu0
        %v628 = vpop.f32.mrb[0].mxu0
        %v629 = vadd.f32 0.0, %v628
        %v630 = vpop.f32.mrb[0].mxu0
        %631 = vdwg.mxu0
        %v632 = vadd.f32 %v569, %v626
        %v633 = vadd.f32 %v570, %v629
        %s634 = scalar_lea.vmem %s1, 14
        %v635 = vld [vmem:[%s634] sm:$0x3]
        %v637 = vunpack.c.l.b16 %v577
        %v638 = vpack.c.b16 %v637, %v637
        %v639 = vshrl.u32 %v584, 16
        %v641 = vshll.u32 %v584, 16
        %v643 = vrot.slane %v641, 1
        %v644 = vor.u32 %v639, %v643
        %v646 = vshll.u32 %v638, 16
        %v648 = vrot.slane %v646, 1
        %v649 = vsel %vm226, %v644, %v648
        %v651 = vsel %vm239, %v649, 0
        %v654 = vsel %vm243, %v635, 0
        %656 = vmatprep.subr.bf16.mxu0 0
        %657 = vmatpush1.bf16.msra.mxu0 %v654
        %658 = vmatprep.subr.bf16.mxu0 0
        %659 = vmatpush1.bf16.msra.mxu0 0
        %660 = vmatprep.subr.bf16.mxu0 0
        %661 = vmatpush1.bf16.msra.mxu0 0
        %662 = vmatprep.subr.bf16.mxu0 0
        %663 = vmatpush1.bf16.msra.mxu0 0
        %664 = vmatprep.subr.bf16.mxu0 0
        %665 = vmatpush1.bf16.msra.mxu0 0
        %666 = vmatprep.subr.bf16.mxu0 0
        %667 = vmatpush1.bf16.msra.mxu0 0
        %668 = vmatprep.subr.bf16.mxu0 0
        %669 = vmatpush1.bf16.msra.mxu0 0
        %670 = vmatprep.subr.bf16.mxu0 0
        %671 = vmatpush1.bf16.msra.mxu0 0
        %672 = vmatprep.subr.bf16.mxu0 0
        %673 = vmatpush1.bf16.msra.mxu0 0
        %674 = vmatprep.subr.bf16.mxu0 0
        %675 = vmatpush1.bf16.msra.mxu0 0
        %676 = vmatprep.subr.bf16.mxu0 0
        %677 = vmatpush1.bf16.msra.mxu0 0
        %678 = vmatprep.subr.bf16.mxu0 0
        %679 = vmatpush1.bf16.msra.mxu0 0
        %680 = vmatprep.subr.bf16.mxu0 0
        %681 = vmatpush1.bf16.msra.mxu0 0
        %682 = vmatprep.subr.bf16.mxu0 0
        %683 = vmatpush1.bf16.msra.mxu0 0
        %684 = vmatprep.subr.bf16.mxu0 0
        %685 = vmatpush1.bf16.msra.mxu0 0
        %686 = vmatprep.subr.bf16.mxu0 0
        %687 = vmatpush1.bf16.msra.mxu0 0
        %688 = vmatprep.mubr.bf16.mxu0 0
        %689 = vmatmul.mubr.bf16.gmra.mrb[0].mxu0 %v651
        %v690 = vpop.f32.mrb[0].mxu0
        %v691 = vadd.f32 0.0, %v690
        %v692 = vpop.f32.mrb[0].mxu0
        %v693 = vpop.f32.mrb[0].mxu0
        %v694 = vadd.f32 0.0, %v693
        %v695 = vpop.f32.mrb[0].mxu0
        %696 = vdwg.mxu0
        %v697 = vadd.f32 %v632, %v691
        %v698 = vadd.f32 %v633, %v694
        %s699 = scalar_lea.vmem %s1, 16
        %v700 = vld [vmem:[%s699] sm:$0x3]
        %v701 = vrot.slane %v584, 1
        %v702 = vrot.slane %v638, 1
        %v703 = vsel %vm336, %v701, %v702
        %v705 = vsel %vm239, %v703, 0
        %v708 = vsel %vm243, %v700, 0
        %710 = vmatprep.subr.bf16.mxu0 0
        %711 = vmatpush1.bf16.msra.mxu0 %v708
        %712 = vmatprep.subr.bf16.mxu0 0
        %713 = vmatpush1.bf16.msra.mxu0 0
        %714 = vmatprep.subr.bf16.mxu0 0
        %715 = vmatpush1.bf16.msra.mxu0 0
        %716 = vmatprep.subr.bf16.mxu0 0
        %717 = vmatpush1.bf16.msra.mxu0 0
        %718 = vmatprep.subr.bf16.mxu0 0
        %719 = vmatpush1.bf16.msra.mxu0 0
        %720 = vmatprep.subr.bf16.mxu0 0
        %721 = vmatpush1.bf16.msra.mxu0 0
        %722 = vmatprep.subr.bf16.mxu0 0
        %723 = vmatpush1.bf16.msra.mxu0 0
        %724 = vmatprep.subr.bf16.mxu0 0
        %725 = vmatpush1.bf16.msra.mxu0 0
        %726 = vmatprep.subr.bf16.mxu0 0
        %727 = vmatpush1.bf16.msra.mxu0 0
        %728 = vmatprep.subr.bf16.mxu0 0
        %729 = vmatpush1.bf16.msra.mxu0 0
        %730 = vmatprep.subr.bf16.mxu0 0
        %731 = vmatpush1.bf16.msra.mxu0 0
        %732 = vmatprep.subr.bf16.mxu0 0
        %733 = vmatpush1.bf16.msra.mxu0 0
        %734 = vmatprep.subr.bf16.mxu0 0
        %735 = vmatpush1.bf16.msra.mxu0 0
        %736 = vmatprep.subr.bf16.mxu0 0
        %737 = vmatpush1.bf16.msra.mxu0 0
        %738 = vmatprep.subr.bf16.mxu0 0
        %739 = vmatpush1.bf16.msra.mxu0 0
        %740 = vmatprep.subr.bf16.mxu0 0
        %741 = vmatpush1.bf16.msra.mxu0 0
        %742 = vmatprep.mubr.bf16.mxu0 0
        %743 = vmatmul.mubr.bf16.gmra.mrb[0].mxu0 %v705
        %v744 = vpop.f32.mrb[0].mxu0
        %v745 = vadd.f32 0.0, %v744
        %v746 = vpop.f32.mrb[0].mxu0
        %v747 = vpop.f32.mrb[0].mxu0
        %v748 = vadd.f32 0.0, %v747
        %v749 = vpop.f32.mrb[0].mxu0
        %750 = vdwg.mxu0
        %v751 = vadd.f32 %v697, %v745
        %v752 = vadd.f32 %v698, %v748
        %v753 = vadd.f32 %v751, %v752
        %v754 = vrot.slane %v753, 4
        %v755 = vadd.f32 %v753, %v754
        %v756 = vrot.slane %v755, 2
        %v757 = vadd.f32 %v755, %v756
        %v758 = vrot.slane %v757, 1
        %v759 = vadd.f32 %v757, %v758
        %v760 = vadd.f32 %v206, %v759
        %v761 = vmul.f32 %v751, %v751
        %v762 = vmul.f32 %v752, %v752
        %v763 = vadd.f32 %v761, %v762
        %v764 = vrot.slane %v763, 4
        %v765 = vadd.f32 %v763, %v764
        %v766 = vrot.slane %v765, 2
        %v767 = vadd.f32 %v765, %v766
        %v768 = vrot.slane %v767, 1
        %v769 = vadd.f32 %v767, %v768
        %v770 = vadd.f32 %v207, %v769
      $region33: #{conv_bn_relu.2} parent=27 // loop_footer
        %s205 = sadd.s32 1, %s201
      $region34: #{conv_bn_relu.2} parent=27 // loop_footer_branch
        %200 = sbr.rel target = $region30
      $region35: #{conv_bn_relu.2} parent=27 // loop_exit
        _
      %771 = vst [vmem:[%s191] sm:$0x1] %v206
      %772 = vst [vmem:[%s196] sm:$0x1] %v207
      %s773 = sadd.s32 %s19, %s20
      %p774 = scmp.lt.s32.totalorder %s773, 1
      %s775 = scalar_select %p774, %s773, 1
      %s776 = scalar_lea.vmem %s2, %s775
      %s777 = sadd.s32 %s19, %s20
      %p778 = scmp.lt.s32.totalorder %s777, 1
      %s779 = scalar_select %p778, %s777, 1
      %s780 = scalar_lea.vmem %s3, %s779
      // Predicated region
      $region36: #{conv_bn_relu.2} parent=27 // pred_check
        %p781 = pneg %p94
      $region37: #{conv_bn_relu.2} parent=27 // pred_check_branch
        %783 = sbr.rel (%p781) target = $region39
      $region38: #{conv_bn_relu.2} parent=27 // pred_region
        %s784 = sadd.s32 %s19, %s20
      $region39: #{conv_bn_relu.2} parent=27 // pred_fallthru
        _
      // Predicated region
      $region40: #{conv_bn_relu.2} parent=27 // pred_check
        %p785 = pneg %p122
      $region41: #{conv_bn_relu.2} parent=27 // pred_check_branch
        %787 = sbr.rel (%p785) target = $region43
      $region42: #{conv_bn_relu.2} parent=27 // pred_region
        %s788 = sadd.s32 %s19, %s20
      $region43: #{conv_bn_relu.2} parent=27 // pred_fallthru
        _
    $region28: #{conv_bn_relu.2} parent=5 // pred_fallthru
      _
    %p789 = scmp.le.s32.totalorder 2, %s10
    // Predicated region
    $region44: #{conv_bn_relu.2} parent=5 // pred_check
      %p790 = pneg %p789
    $region45: #{conv_bn_relu.2} parent=5 // pred_check_branch
      %792 = sbr.rel (%p790) target = $region47
    $region46: #{conv_bn_relu.2} parent=5 // pred_region
      %s793 = ssub.s32 %s10, 2
      // Predicated region
      $region48: #{conv_bn_relu.2} parent=46 // pred_check
        %p794 = pneg %p100
      $region49: #{conv_bn_relu.2} parent=46 // pred_check_branch
        %796 = sbr.rel (%p794) target = $region51
      $region50: #{conv_bn_relu.2} parent=46 // pred_region
        %s797 = sadd.s32 %s21, %s22
        %p798 = scmp.lt.s32.totalorder %s797, 1
        %s799 = scalar_select %p798, %s797, 1
        %s800 = scalar_lea.vmem %s2, %s799
      $region51: #{conv_bn_relu.2} parent=46 // pred_fallthru
        _
      // Predicated region
      $region52: #{conv_bn_relu.2} parent=46 // pred_check
        %p801 = pneg %p128
      $region53: #{conv_bn_relu.2} parent=46 // pred_check_branch
        %803 = sbr.rel (%p801) target = $region55
      $region54: #{conv_bn_relu.2} parent=46 // pred_region
        %s804 = sadd.s32 %s21, %s22
        %p805 = scmp.lt.s32.totalorder %s804, 1
        %s806 = scalar_select %p805, %s804, 1
        %s807 = scalar_lea.vmem %s3, %s806
      $region55: #{conv_bn_relu.2} parent=46 // pred_fallthru
        _
    $region47: #{conv_bn_relu.2} parent=5 // pred_fallthru
      _
  $region6: #{conv_bn_relu.2} parent=0 // loop_footer
    %s14 = sadd.s32 1, %s10
  $region7: #{conv_bn_relu.2} parent=0 // loop_footer_branch
    %9 = sbr.rel target = $region3
  $region8: #{conv_bn_relu.2} parent=0 // loop_exit
    _

</llo_original>
